<compile_context>
chip_gen: v7x
topology: tpu7x:2x2x1
jax: 0.10.0
libtpu: 0.0.40
codegen_flags: <defaults>
</compile_context>

<pallas_src>
import functools

import jax
import jax.numpy as jnp
from jax.experimental import pallas as pl
from jax.experimental.pallas import tpu as pltpu

# ---------------- small synthetic Nemotron config ----------------
VOCAB = 256
HIDDEN = 128
N_HEADS = 4
N_KV_HEADS = 2
HEAD_DIM = HIDDEN // N_HEADS           # 32
INTER = 256
N_LAYERS = 2
SEQ = 8
ROPE_THETA = 10000.0
PARTIAL_ROTARY = 0.5
ROTARY_DIM = int(HEAD_DIM * PARTIAL_ROTARY)   # 16
NORM_EPS = 1e-5
Q_SIZE = N_HEADS * HEAD_DIM            # 128
KV_SIZE = N_KV_HEADS * HEAD_DIM        # 64
QKV_SIZE = Q_SIZE + 2 * KV_SIZE        # 256

assert N_HEADS % N_KV_HEADS == 0


# ---------------- shared in-kernel math ----------------
def _ln1p(x, w, b, eps):
    """NemotronLayerNorm1P: LayerNorm with effective scale (weight + 1). f32 math."""
    mean = jnp.mean(x, axis=-1, keepdims=True)
    var = jnp.mean(jnp.square(x - mean), axis=-1, keepdims=True)
    xn = (x - mean) * jax.lax.rsqrt(var + eps)
    return xn * (w.astype(jnp.float32) + 1.0) + b.astype(jnp.float32)


# ---------------- single fused whole-model kernel (grid over layers) ----------------
def _model_kernel(eps, n_heads, n_kv_heads, head_dim,
                  h_ref, cos_ref, sin_ref, pq_ref,
                  ln1w_ref, ln1b_ref, qkvw_ref, ow_ref,
                  ln2w_ref, ln2b_ref, upw_ref, downw_ref,
                  normw_ref, normb_ref,
                  out_ref, s_scr):
    f32 = jnp.float32
    bf16 = jnp.bfloat16
    layer = pl.program_id(0)

    @pl.when(layer == 0)
    def _():
        # residual=None path of the first layer: residual := hidden, so the
        # carried state (hidden + residual) is just the embedding output.
        s_scr[...] = h_ref[...].astype(f32)

    s = s_scr[...]                                     # hidden + residual, f32 [T, H]

    # ---- input_layernorm (layernorm1p) ----
    ln1 = _ln1p(s, ln1w_ref[...], ln1b_ref[...], eps)

    # ---- fused qkv projection: one lane-dense [T, 256] bf16 MXU matmul ----
    qkv = jnp.dot(ln1.astype(bf16), qkvw_ref[...], preferred_element_type=f32)
    q_size = n_heads * head_dim
    kv_size = n_kv_heads * head_dim
    q = qkv[:, :q_size]
    k = qkv[:, q_size:q_size + kv_size]
    v = qkv[:, q_size + kv_size:]

    # TODO(synk): MSCALE env-var-driven q scaling skipped (MSCALE unset -> identity).

    # ---- partial-rotary neox RoPE: x*COS + (x @ P_partner)*SIN ----
    # P is a 0/1 matrix (exact in bf16) -> cheap bf16 MXU pass, not f32.
    # 1/sqrt(head_dim) was folded into the q columns of qkvw at init time.
    cos = cos_ref[...]                                 # [T, Q_SIZE] f32
    sin = sin_ref[...]                                 # [T, Q_SIZE] f32 (signed)
    pq = pq_ref[...]                                   # [Q_SIZE, Q_SIZE] bf16
    q = q * cos + jnp.dot(q.astype(bf16), pq, preferred_element_type=f32) * sin
    # K-head RoPE factors/partner matrix are the leading KV_SIZE lanes of the q ones.
    k = (k * cos[:, :kv_size]
         + jnp.dot(k.astype(bf16), pq[:kv_size, :kv_size],
                   preferred_element_type=f32) * sin[:, :kv_size])

    # ---- causal GQA attention (KV never duplicated; sibling q heads reuse kv lanes) ----
    T = q.shape[0]
    qi = jax.lax.broadcasted_iota(jnp.int32, (T, T), 0)
    ki = jax.lax.broadcasted_iota(jnp.int32, (T, T), 1)
    causal = ki <= qi                                  # built once for all heads
    rep = n_heads // n_kv_heads

    heads = []
    for h in range(n_heads):                           # static unroll (4 heads)
        kvh = h // rep
        q_h = q[:, h * head_dim:(h + 1) * head_dim].astype(bf16)
        k_h = k[:, kvh * head_dim:(kvh + 1) * head_dim].astype(bf16)
        v_h = v[:, kvh * head_dim:(kvh + 1) * head_dim].astype(bf16)
        sc = jax.lax.dot_general(q_h, k_h, (((1,), (1,)), ((), ())),
                                 preferred_element_type=f32)          # [T, T]
        sc = jnp.where(causal, sc, -1e30)
        m = jnp.max(sc, axis=-1, keepdims=True)
        p = jnp.exp(sc - m)
        denom = jnp.sum(p, axis=-1, keepdims=True)
        p = p * pl.reciprocal(denom, approx=True)       # EUP reciprocal, not VALU divide
        heads.append(jnp.dot(p.astype(bf16), v_h, preferred_element_type=f32))
    attn = jnp.concatenate(heads, axis=-1).astype(bf16)               # [T, Q_SIZE]

    # ---- o_proj: one lane-dense K=Q_SIZE matmul ----
    attn_out = jnp.dot(attn, ow_ref[...], preferred_element_type=f32)

    # ---- post_attention_layernorm (residual-add fused) ----
    s2 = attn_out + s
    ln2 = _ln1p(s2, ln2w_ref[...], ln2b_ref[...], eps)

    # ---- MLP: up_proj -> relu^2 -> down_proj ----
    up = jnp.dot(ln2.astype(bf16), upw_ref[...], preferred_element_type=f32)
    r = jnp.maximum(up, 0.0)
    act = (r * r).astype(bf16)                          # Nemotron hidden_act = "relu2"
    down = jnp.dot(act, downw_ref[...], preferred_element_type=f32)

    s_new = down + s2                                   # next (hidden + residual)
    s_scr[...] = s_new

    # ---- final layernorm1p folded into the last grid step ----
    @pl.when(layer == pl.num_programs(0) - 1)
    def _():
        out_ref[...] = _ln1p(s_new, normw_ref[...], normb_ref[...],
                             eps).astype(out_ref.dtype)


# ---------------- JAX glue ----------------
def build_rope_tables(positions):
    """Lane-mapped COS / signed-SIN tables for neox partial rotary on the flat
    [T, n_heads*head_dim] q layout (k uses the first KV_SIZE lanes)."""
    T = positions.shape[0]
    inv_freq = 1.0 / (ROPE_THETA ** (
        jnp.arange(0, ROTARY_DIM, 2, dtype=jnp.float32) / ROTARY_DIM))       # [half]
    freqs = positions.astype(jnp.float32)[:, None] * inv_freq[None, :]       # [T, half]
    cos = jnp.cos(freqs)
    sin = jnp.sin(freqs)
    pass_dim = HEAD_DIM - ROTARY_DIM
    cos_head = jnp.concatenate(
        [cos, cos, jnp.ones((T, pass_dim), jnp.float32)], axis=-1)           # [T, head_dim]
    sin_head = jnp.concatenate(
        [-sin, sin, jnp.zeros((T, pass_dim), jnp.float32)], axis=-1)
    return jnp.tile(cos_head, (1, N_HEADS)), jnp.tile(sin_head, (1, N_HEADS))


def build_rope_partner_matrix():
    """Static 0/1 rotary-partner permutation (bf16, exact), computed once at init.
    P[j, l] = 1 iff j == partner(l) and lane l is rotary, so (x @ P)[t, l] =
    x[t, partner(l)] on rotary lanes and 0 elsewhere."""
    half = ROTARY_DIM // 2
    lanes = jnp.arange(Q_SIZE)
    d = lanes % HEAD_DIM
    partner = jnp.where(d < half, lanes + half,
                        jnp.where(d < ROTARY_DIM, lanes - half, lanes))
    rot = (d < ROTARY_DIM).astype(jnp.float32)
    p = (lanes[:, None] == partner[None, :]).astype(jnp.float32) * rot[None, :]
    return p.astype(jnp.bfloat16)


def init_params(key):
    def normal(k, shape, scale=0.02, dtype=jnp.float32):
        return (scale * jax.random.normal(k, shape, jnp.float32)).astype(dtype)

    keys = jax.random.split(key, 3 + N_LAYERS)
    scale_q = HEAD_DIM ** -0.5
    layers = []
    for i in range(N_LAYERS):
        lk = jax.random.split(keys[3 + i], 8)
        qkv_w = normal(lk[2], (HIDDEN, QKV_SIZE))
        # Fold the attention scale 1/sqrt(head_dim) into the q columns (commutes
        # with the lane-wise rotation) -> no in-kernel q*scale multiply.
        qkv_w = qkv_w.at[:, :Q_SIZE].multiply(scale_q)
        layers.append(dict(
            ln1_w=normal(lk[0], (1, HIDDEN), 0.1),
            ln1_b=normal(lk[1], (1, HIDDEN), 0.1),
            qkv_w=qkv_w.astype(jnp.bfloat16),
            o_w=normal(lk[3], (Q_SIZE, HIDDEN), dtype=jnp.bfloat16),
            ln2_w=normal(lk[4], (1, HIDDEN), 0.1),
            ln2_b=normal(lk[5], (1, HIDDEN), 0.1),
            up_w=normal(lk[6], (HIDDEN, INTER), dtype=jnp.bfloat16),
            down_w=normal(lk[7], (INTER, HIDDEN), dtype=jnp.bfloat16),
        ))
    stacked = {name: jnp.stack([lp[name] for lp in layers]) for name in layers[0]}
    return {
        'embed': normal(keys[0], (VOCAB, HIDDEN)),
        'norm_w': normal(keys[1], (1, HIDDEN), 0.1),
        'norm_b': normal(keys[2], (1, HIDDEN), 0.1),
        'stacked': stacked,          # per-layer weights stacked on a leading L axis
        'rope_p': build_rope_partner_matrix(),
    }


def _rep_spec(shape):
    """Same block every grid step (constant input / resident output)."""
    nd = len(shape)
    return pl.BlockSpec(shape, lambda l, _n=nd: (0,) * _n)


def _layer_spec(shape):
    """Per-layer slice of an [L, ...] stacked weight; leading dim squeezed."""
    nd = len(shape)
    return pl.BlockSpec((None,) + shape, lambda l, _n=nd: (l,) + (0,) * _n)


def nemotron_forward(params, input_ids, positions):
    # TODO(synk): embedding row-gather could be pulled into the kernel via
    # scalar-prefetched input_ids + pl.Element BlockSpec; kept as an XLA gather.
    h = params['embed'][input_ids]                    # [T, H]
    T, H = h.shape
    cos_q, sin_q = build_rope_tables(positions)       # shared across layers
    sp = params['stacked']

    inputs = (h, cos_q, sin_q, params['rope_p'],
              sp['ln1_w'], sp['ln1_b'], sp['qkv_w'], sp['o_w'],
              sp['ln2_w'], sp['ln2_b'], sp['up_w'], sp['down_w'],
              params['norm_w'], params['norm_b'])
    in_specs = [
        _rep_spec((T, H)),                  # h (used only at layer 0)
        _rep_spec((T, Q_SIZE)),             # cos
        _rep_spec((T, Q_SIZE)),             # sin (signed)
        _rep_spec((Q_SIZE, Q_SIZE)),        # rotary partner permutation (bf16)
        _layer_spec((1, H)),                # ln1_w
        _layer_spec((1, H)),                # ln1_b
        _layer_spec((H, QKV_SIZE)),         # fused qkv weight
        _layer_spec((Q_SIZE, H)),           # o_proj weight
        _layer_spec((1, H)),                # ln2_w
        _layer_spec((1, H)),                # ln2_b
        _layer_spec((H, INTER)),            # up_proj weight
        _layer_spec((INTER, H)),            # down_proj weight
        _rep_spec((1, H)),                  # final norm weight
        _rep_spec((1, H)),                  # final norm bias
    ]

    kernel = functools.partial(_model_kernel, NORM_EPS, N_HEADS, N_KV_HEADS, HEAD_DIM)
    return pl.pallas_call(
        kernel,
        out_shape=jax.ShapeDtypeStruct((T, H), h.dtype),
        grid_spec=pltpu.PrefetchScalarGridSpec(
            num_scalar_prefetch=0,
            grid=(N_LAYERS,),
            in_specs=in_specs,
            out_specs=pl.BlockSpec((T, H), lambda l: (0, 0)),
            scratch_shapes=[pltpu.VMEM((T, H), jnp.float32)]),
        compiler_params=pltpu.CompilerParams(
            dimension_semantics=("arbitrary",)),      # layer axis carries state
    )(*inputs)


if __name__ == "__main__":
    key = jax.random.PRNGKey(0)
    pkey, ikey = jax.random.split(key)
    params = init_params(pkey)
    input_ids = jax.random.randint(ikey, (SEQ,), 0, VOCAB)
    positions = jnp.arange(SEQ, dtype=jnp.int32)

    fwd = jax.jit(nemotron_forward)
    out = jax.block_until_ready(fwd(params, input_ids, positions))
    assert out.shape == (SEQ, HIDDEN), out.shape
    assert bool(jnp.all(jnp.isfinite(out)))
    print("KERNEL_OK")
</pallas_src>

<mosaic_0001>
module attributes {stable_mosaic.version = 11 : i64} {
  func.func @_model_kernel(%arg0: i32, %arg1: memref<8x128xf32, #tpu.memory_space<vmem>>, %arg2: memref<8x128xf32, #tpu.memory_space<vmem>>, %arg3: memref<8x128xf32, #tpu.memory_space<vmem>>, %arg4: memref<128x128xbf16, #tpu.memory_space<vmem>>, %arg5: memref<1x1x128xf32, #tpu.memory_space<vmem>>, %arg6: memref<1x1x128xf32, #tpu.memory_space<vmem>>, %arg7: memref<1x128x256xbf16, #tpu.memory_space<vmem>>, %arg8: memref<1x128x128xbf16, #tpu.memory_space<vmem>>, %arg9: memref<1x1x128xf32, #tpu.memory_space<vmem>>, %arg10: memref<1x1x128xf32, #tpu.memory_space<vmem>>, %arg11: memref<1x128x256xbf16, #tpu.memory_space<vmem>>, %arg12: memref<1x256x128xbf16, #tpu.memory_space<vmem>>, %arg13: memref<1x128xf32, #tpu.memory_space<vmem>>, %arg14: memref<1x128xf32, #tpu.memory_space<vmem>>, %arg15: memref<8x128xf32, #tpu.memory_space<vmem>>, %arg16: memref<8x128xf32, #tpu.memory_space<vmem>>) attributes {dimension_semantics = [#tpu.dimension_semantics<arbitrary>], iteration_bounds = array<i64: 2>, scalar_prefetch = 0 : i64, scratch_operands = 1 : i64, tpu.core_type = #tpu.core_type<tc>, window_params = [{pipeline_mode = #tpu.pipeline_mode<synchronous>, transform_indices = @transform_0, window_bounds = array<i64: 8, 128>}, {pipeline_mode = #tpu.pipeline_mode<synchronous>, transform_indices = @transform_1, window_bounds = array<i64: 8, 128>}, {pipeline_mode = #tpu.pipeline_mode<synchronous>, transform_indices = @transform_2, window_bounds = array<i64: 8, 128>}, {pipeline_mode = #tpu.pipeline_mode<synchronous>, transform_indices = @transform_3, window_bounds = array<i64: 128, 128>}, {transform_indices = @transform_4, window_bounds = array<i64: 1, 1, 128>}, {transform_indices = @transform_5, window_bounds = array<i64: 1, 1, 128>}, {transform_indices = @transform_6, window_bounds = array<i64: 1, 128, 256>}, {transform_indices = @transform_7, window_bounds = array<i64: 1, 128, 128>}, {transform_indices = @transform_8, window_bounds = array<i64: 1, 1, 128>}, {transform_indices = @transform_9, window_bounds = array<i64: 1, 1, 128>}, {transform_indices = @transform_10, window_bounds = array<i64: 1, 128, 256>}, {transform_indices = @transform_11, window_bounds = array<i64: 1, 256, 128>}, {pipeline_mode = #tpu.pipeline_mode<synchronous>, transform_indices = @transform_12, window_bounds = array<i64: 1, 128>}, {pipeline_mode = #tpu.pipeline_mode<synchronous>, transform_indices = @transform_13, window_bounds = array<i64: 1, 128>}, {pipeline_mode = #tpu.pipeline_mode<synchronous>, transform_indices = @transform_14, window_bounds = array<i64: 8, 128>}]} {
    %c0_i32 = arith.constant 0 : i32
    %0 = arith.cmpi eq, %arg0, %c0_i32 : i32
    %1 = arith.extui %0 : i1 to i32
    %c0_i32_0 = arith.constant 0 : i32
    %2 = arith.cmpi ne, %1, %c0_i32_0 : i32
    scf.if %2 {
      %c0_73 = arith.constant 0 : index
      %c0_74 = arith.constant 0 : index
      %192 = vector.load %arg1[%c0_73, %c0_74] : memref<8x128xf32, #tpu.memory_space<vmem>>, vector<8x128xf32>
      %c0_75 = arith.constant 0 : index
      %c0_76 = arith.constant 0 : index
      %193 = vector.load %arg16[%c0_75, %c0_76] : memref<8x128xf32, #tpu.memory_space<vmem>>, vector<8x128xf32>
      tpu.vector_store %arg16[%c0_75, %c0_76], %192 {strides = array<i32>} : memref<8x128xf32, #tpu.memory_space<vmem>>, vector<8x128xf32>,
    } else {
    }
    %c0 = arith.constant 0 : index
    %c0_1 = arith.constant 0 : index
    %3 = vector.load %arg16[%c0, %c0_1] : memref<8x128xf32, #tpu.memory_space<vmem>>, vector<8x128xf32>
    %c0_2 = arith.constant 0 : index
    %c0_3 = arith.constant 0 : index
    %c0_4 = arith.constant 0 : index
    %4 = vector.load %arg5[%c0_2, %c0_3, %c0_4] : memref<1x1x128xf32, #tpu.memory_space<vmem>>, vector<1x1x128xf32>
    %5 = vector.shape_cast %4 : vector<1x1x128xf32> to vector<1x128xf32>
    %c0_5 = arith.constant 0 : index
    %c0_6 = arith.constant 0 : index
    %c0_7 = arith.constant 0 : index
    %6 = vector.load %arg6[%c0_5, %c0_6, %c0_7] : memref<1x1x128xf32, #tpu.memory_space<vmem>>, vector<1x1x128xf32>
    %7 = vector.shape_cast %6 : vector<1x1x128xf32> to vector<1x128xf32>
    %cst = arith.constant dense<0.000000e+00> : vector<8xf32>
    %8 = vector.multi_reduction <add>, %3, %cst [1] : vector<8x128xf32> to vector<8xf32>
    %9 = vector.shape_cast %8 : vector<8xf32> to vector<8x1xf32>
    %cst_8 = arith.constant 1.280000e+02 : f32
    %10 = vector.broadcast %cst_8 : f32 to vector<8x1xf32>
    %11 = arith.divf %9, %10 : vector<8x1xf32>
    %12 = vector.broadcast %11 : vector<8x1xf32> to vector<8x128xf32>
    %13 = arith.subf %3, %12 : vector<8x128xf32>
    %14 = arith.mulf %13, %13 : vector<8x128xf32>
    %cst_9 = arith.constant dense<0.000000e+00> : vector<8xf32>
    %15 = vector.multi_reduction <add>, %14, %cst_9 [1] : vector<8x128xf32> to vector<8xf32>
    %16 = vector.shape_cast %15 : vector<8xf32> to vector<8x1xf32>
    %cst_10 = arith.constant 1.280000e+02 : f32
    %17 = vector.broadcast %cst_10 : f32 to vector<8x1xf32>
    %18 = arith.divf %16, %17 : vector<8x1xf32>
    %19 = vector.broadcast %11 : vector<8x1xf32> to vector<8x128xf32>
    %20 = arith.subf %3, %19 : vector<8x128xf32>
    %cst_11 = arith.constant 9.99999974E-6 : f32
    %21 = vector.broadcast %cst_11 : f32 to vector<8x1xf32>
    %22 = arith.addf %18, %21 : vector<8x1xf32>
    %23 = math.rsqrt %22 : vector<8x1xf32>
    %24 = vector.broadcast %23 : vector<8x1xf32> to vector<8x128xf32>
    %25 = arith.mulf %20, %24 : vector<8x128xf32>
    %cst_12 = arith.constant 1.000000e+00 : f32
    %26 = vector.broadcast %cst_12 : f32 to vector<1x128xf32>
    %27 = arith.addf %5, %26 : vector<1x128xf32>
    %28 = vector.broadcast %27 : vector<1x128xf32> to vector<8x128xf32>
    %29 = arith.mulf %25, %28 : vector<8x128xf32>
    %30 = vector.broadcast %7 : vector<1x128xf32> to vector<8x128xf32>
    %31 = arith.addf %29, %30 : vector<8x128xf32>
    %32 = arith.truncf %31 : vector<8x128xf32> to vector<8x128xbf16>
    %c0_13 = arith.constant 0 : index
    %c0_14 = arith.constant 0 : index
    %c0_15 = arith.constant 0 : index
    %33 = vector.load %arg7[%c0_13, %c0_14, %c0_15] : memref<1x128x256xbf16, #tpu.memory_space<vmem>>, vector<1x128x256xbf16>
    %34 = vector.shape_cast %33 : vector<1x128x256xbf16> to vector<128x256xbf16>
    %cst_16 = arith.constant dense<0.000000e+00> : vector<8x256xf32>
    %35 = tpu.matmul %32, %34, %cst_16 {dimension_numbers = #tpu.dot_dimension_numbers<[1], [0], [0], [1], [0, 0, 1, 1], [], []>} : vector<8x128xbf16>, vector<128x256xbf16>, vector<8x256xf32> -> vector<8x256xf32>
    %36 = vector.extract_strided_slice %35 {offsets = [0, 0], sizes = [8, 128], strides = [1, 1]} : vector<8x256xf32> to vector<8x128xf32>
    %37 = vector.extract_strided_slice %35 {offsets = [0, 128], sizes = [8, 64], strides = [1, 1]} : vector<8x256xf32> to vector<8x64xf32>
    %38 = vector.extract_strided_slice %35 {offsets = [0, 192], sizes = [8, 64], strides = [1, 1]} : vector<8x256xf32> to vector<8x64xf32>
    %c0_17 = arith.constant 0 : index
    %c0_18 = arith.constant 0 : index
    %39 = vector.load %arg2[%c0_17, %c0_18] : memref<8x128xf32, #tpu.memory_space<vmem>>, vector<8x128xf32>
    %c0_19 = arith.constant 0 : index
    %c0_20 = arith.constant 0 : index
    %40 = vector.load %arg3[%c0_19, %c0_20] : memref<8x128xf32, #tpu.memory_space<vmem>>, vector<8x128xf32>
    %c0_21 = arith.constant 0 : index
    %c0_22 = arith.constant 0 : index
    %41 = vector.load %arg4[%c0_21, %c0_22] : memref<128x128xbf16, #tpu.memory_space<vmem>>, vector<128x128xbf16>
    %42 = arith.mulf %36, %39 : vector<8x128xf32>
    %43 = arith.truncf %36 : vector<8x128xf32> to vector<8x128xbf16>
    %cst_23 = arith.constant dense<0.000000e+00> : vector<8x128xf32>
    %44 = tpu.matmul %43, %41, %cst_23 {dimension_numbers = #tpu.dot_dimension_numbers<[1], [0], [0], [1], [0, 0, 1, 1], [], []>} : vector<8x128xbf16>, vector<128x128xbf16>, vector<8x128xf32> -> vector<8x128xf32>
    %45 = arith.mulf %44, %40 : vector<8x128xf32>
    %46 = arith.addf %42, %45 : vector<8x128xf32>
    %47 = vector.extract_strided_slice %39 {offsets = [0, 0], sizes = [8, 64], strides = [1, 1]} : vector<8x128xf32> to vector<8x64xf32>
    %48 = arith.mulf %37, %47 : vector<8x64xf32>
    %49 = arith.truncf %37 : vector<8x64xf32> to vector<8x64xbf16>
    %50 = vector.extract_strided_slice %41 {offsets = [0, 0], sizes = [64, 64], strides = [1, 1]} : vector<128x128xbf16> to vector<64x64xbf16>
    %cst_24 = arith.constant dense<0.000000e+00> : vector<8x64xf32>
    %51 = tpu.matmul %49, %50, %cst_24 {dimension_numbers = #tpu.dot_dimension_numbers<[1], [0], [0], [1], [0, 0, 1, 1], [], []>} : vector<8x64xbf16>, vector<64x64xbf16>, vector<8x64xf32> -> vector<8x64xf32>
    %52 = vector.extract_strided_slice %40 {offsets = [0, 0], sizes = [8, 64], strides = [1, 1]} : vector<8x128xf32> to vector<8x64xf32>
    %53 = arith.mulf %51, %52 : vector<8x64xf32>
    %54 = arith.addf %48, %53 : vector<8x64xf32>
    %55 = tpu.iota {dimensions = array<i32: 0>} : vector<8x8xi32>
    %56 = tpu.iota {dimensions = array<i32: 1>} : vector<8x8xi32>
    %57 = arith.cmpi sle, %56, %55 : vector<8x8xi32>
    %58 = vector.extract_strided_slice %46 {offsets = [0, 0], sizes = [8, 32], strides = [1, 1]} : vector<8x128xf32> to vector<8x32xf32>
    %59 = arith.truncf %58 : vector<8x32xf32> to vector<8x32xbf16>
    %60 = vector.extract_strided_slice %54 {offsets = [0, 0], sizes = [8, 32], strides = [1, 1]} : vector<8x64xf32> to vector<8x32xf32>
    %61 = arith.truncf %60 : vector<8x32xf32> to vector<8x32xbf16>
    %62 = vector.extract_strided_slice %38 {offsets = [0, 0], sizes = [8, 32], strides = [1, 1]} : vector<8x64xf32> to vector<8x32xf32>
    %63 = arith.truncf %62 : vector<8x32xf32> to vector<8x32xbf16>
    %cst_25 = arith.constant dense<0.000000e+00> : vector<8x8xf32>
    %64 = tpu.matmul %59, %61, %cst_25 {dimension_numbers = #tpu.dot_dimension_numbers<[1], [1], [0], [0], [0, 0, 1, 0], [], []>} : vector<8x32xbf16>, vector<8x32xbf16>, vector<8x8xf32> -> vector<8x8xf32>
    %cst_26 = arith.constant -1.000000e+30 : f32
    %65 = vector.broadcast %cst_26 : f32 to vector<8x8xf32>
    %66 = arith.select %57, %64, %65 : vector<8x8xi1>, vector<8x8xf32>
    %cst_27 = arith.constant dense<0xFF800000> : vector<8xf32>
    %67 = vector.multi_reduction <maximumf>, %66, %cst_27 [1] : vector<8x8xf32> to vector<8xf32>
    %68 = vector.shape_cast %67 : vector<8xf32> to vector<8x1xf32>
    %69 = vector.broadcast %68 : vector<8x1xf32> to vector<8x8xf32>
    %70 = arith.subf %66, %69 : vector<8x8xf32>
    %71 = math.exp %70 : vector<8x8xf32>
    %cst_28 = arith.constant dense<0.000000e+00> : vector<8xf32>
    %72 = vector.multi_reduction <add>, %71, %cst_28 [1] : vector<8x8xf32> to vector<8xf32>
    %73 = vector.shape_cast %72 : vector<8xf32> to vector<8x1xf32>
    %74 = tpu.reciprocal %73 {approx = true} : vector<8x1xf32> -> vector<8x1xf32>
    %75 = vector.broadcast %74 : vector<8x1xf32> to vector<8x8xf32>
    %76 = arith.mulf %71, %75 : vector<8x8xf32>
    %77 = arith.truncf %76 : vector<8x8xf32> to vector<8x8xbf16>
    %cst_29 = arith.constant dense<0.000000e+00> : vector<8x32xf32>
    %78 = tpu.matmul %77, %63, %cst_29 {dimension_numbers = #tpu.dot_dimension_numbers<[1], [0], [0], [1], [0, 0, 1, 1], [], []>} : vector<8x8xbf16>, vector<8x32xbf16>, vector<8x32xf32> -> vector<8x32xf32>
    %79 = vector.extract_strided_slice %46 {offsets = [0, 32], sizes = [8, 32], strides = [1, 1]} : vector<8x128xf32> to vector<8x32xf32>
    %80 = arith.truncf %79 : vector<8x32xf32> to vector<8x32xbf16>
    %81 = vector.extract_strided_slice %54 {offsets = [0, 0], sizes = [8, 32], strides = [1, 1]} : vector<8x64xf32> to vector<8x32xf32>
    %82 = arith.truncf %81 : vector<8x32xf32> to vector<8x32xbf16>
    %83 = vector.extract_strided_slice %38 {offsets = [0, 0], sizes = [8, 32], strides = [1, 1]} : vector<8x64xf32> to vector<8x32xf32>
    %84 = arith.truncf %83 : vector<8x32xf32> to vector<8x32xbf16>
    %cst_30 = arith.constant dense<0.000000e+00> : vector<8x8xf32>
    %85 = tpu.matmul %80, %82, %cst_30 {dimension_numbers = #tpu.dot_dimension_numbers<[1], [1], [0], [0], [0, 0, 1, 0], [], []>} : vector<8x32xbf16>, vector<8x32xbf16>, vector<8x8xf32> -> vector<8x8xf32>
    %cst_31 = arith.constant -1.000000e+30 : f32
    %86 = vector.broadcast %cst_31 : f32 to vector<8x8xf32>
    %87 = arith.select %57, %85, %86 : vector<8x8xi1>, vector<8x8xf32>
    %cst_32 = arith.constant dense<0xFF800000> : vector<8xf32>
    %88 = vector.multi_reduction <maximumf>, %87, %cst_32 [1] : vector<8x8xf32> to vector<8xf32>
    %89 = vector.shape_cast %88 : vector<8xf32> to vector<8x1xf32>
    %90 = vector.broadcast %89 : vector<8x1xf32> to vector<8x8xf32>
    %91 = arith.subf %87, %90 : vector<8x8xf32>
    %92 = math.exp %91 : vector<8x8xf32>
    %cst_33 = arith.constant dense<0.000000e+00> : vector<8xf32>
    %93 = vector.multi_reduction <add>, %92, %cst_33 [1] : vector<8x8xf32> to vector<8xf32>
    %94 = vector.shape_cast %93 : vector<8xf32> to vector<8x1xf32>
    %95 = tpu.reciprocal %94 {approx = true} : vector<8x1xf32> -> vector<8x1xf32>
    %96 = vector.broadcast %95 : vector<8x1xf32> to vector<8x8xf32>
    %97 = arith.mulf %92, %96 : vector<8x8xf32>
    %98 = arith.truncf %97 : vector<8x8xf32> to vector<8x8xbf16>
    %cst_34 = arith.constant dense<0.000000e+00> : vector<8x32xf32>
    %99 = tpu.matmul %98, %84, %cst_34 {dimension_numbers = #tpu.dot_dimension_numbers<[1], [0], [0], [1], [0, 0, 1, 1], [], []>} : vector<8x8xbf16>, vector<8x32xbf16>, vector<8x32xf32> -> vector<8x32xf32>
    %100 = vector.extract_strided_slice %46 {offsets = [0, 64], sizes = [8, 32], strides = [1, 1]} : vector<8x128xf32> to vector<8x32xf32>
    %101 = arith.truncf %100 : vector<8x32xf32> to vector<8x32xbf16>
    %102 = vector.extract_strided_slice %54 {offsets = [0, 32], sizes = [8, 32], strides = [1, 1]} : vector<8x64xf32> to vector<8x32xf32>
    %103 = arith.truncf %102 : vector<8x32xf32> to vector<8x32xbf16>
    %104 = vector.extract_strided_slice %38 {offsets = [0, 32], sizes = [8, 32], strides = [1, 1]} : vector<8x64xf32> to vector<8x32xf32>
    %105 = arith.truncf %104 : vector<8x32xf32> to vector<8x32xbf16>
    %cst_35 = arith.constant dense<0.000000e+00> : vector<8x8xf32>
    %106 = tpu.matmul %101, %103, %cst_35 {dimension_numbers = #tpu.dot_dimension_numbers<[1], [1], [0], [0], [0, 0, 1, 0], [], []>} : vector<8x32xbf16>, vector<8x32xbf16>, vector<8x8xf32> -> vector<8x8xf32>
    %cst_36 = arith.constant -1.000000e+30 : f32
    %107 = vector.broadcast %cst_36 : f32 to vector<8x8xf32>
    %108 = arith.select %57, %106, %107 : vector<8x8xi1>, vector<8x8xf32>
    %cst_37 = arith.constant dense<0xFF800000> : vector<8xf32>
    %109 = vector.multi_reduction <maximumf>, %108, %cst_37 [1] : vector<8x8xf32> to vector<8xf32>
    %110 = vector.shape_cast %109 : vector<8xf32> to vector<8x1xf32>
    %111 = vector.broadcast %110 : vector<8x1xf32> to vector<8x8xf32>
    %112 = arith.subf %108, %111 : vector<8x8xf32>
    %113 = math.exp %112 : vector<8x8xf32>
    %cst_38 = arith.constant dense<0.000000e+00> : vector<8xf32>
    %114 = vector.multi_reduction <add>, %113, %cst_38 [1] : vector<8x8xf32> to vector<8xf32>
    %115 = vector.shape_cast %114 : vector<8xf32> to vector<8x1xf32>
    %116 = tpu.reciprocal %115 {approx = true} : vector<8x1xf32> -> vector<8x1xf32>
    %117 = vector.broadcast %116 : vector<8x1xf32> to vector<8x8xf32>
    %118 = arith.mulf %113, %117 : vector<8x8xf32>
    %119 = arith.truncf %118 : vector<8x8xf32> to vector<8x8xbf16>
    %cst_39 = arith.constant dense<0.000000e+00> : vector<8x32xf32>
    %120 = tpu.matmul %119, %105, %cst_39 {dimension_numbers = #tpu.dot_dimension_numbers<[1], [0], [0], [1], [0, 0, 1, 1], [], []>} : vector<8x8xbf16>, vector<8x32xbf16>, vector<8x32xf32> -> vector<8x32xf32>
    %121 = vector.extract_strided_slice %46 {offsets = [0, 96], sizes = [8, 32], strides = [1, 1]} : vector<8x128xf32> to vector<8x32xf32>
    %122 = arith.truncf %121 : vector<8x32xf32> to vector<8x32xbf16>
    %123 = vector.extract_strided_slice %54 {offsets = [0, 32], sizes = [8, 32], strides = [1, 1]} : vector<8x64xf32> to vector<8x32xf32>
    %124 = arith.truncf %123 : vector<8x32xf32> to vector<8x32xbf16>
    %125 = vector.extract_strided_slice %38 {offsets = [0, 32], sizes = [8, 32], strides = [1, 1]} : vector<8x64xf32> to vector<8x32xf32>
    %126 = arith.truncf %125 : vector<8x32xf32> to vector<8x32xbf16>
    %cst_40 = arith.constant dense<0.000000e+00> : vector<8x8xf32>
    %127 = tpu.matmul %122, %124, %cst_40 {dimension_numbers = #tpu.dot_dimension_numbers<[1], [1], [0], [0], [0, 0, 1, 0], [], []>} : vector<8x32xbf16>, vector<8x32xbf16>, vector<8x8xf32> -> vector<8x8xf32>
    %cst_41 = arith.constant -1.000000e+30 : f32
    %128 = vector.broadcast %cst_41 : f32 to vector<8x8xf32>
    %129 = arith.select %57, %127, %128 : vector<8x8xi1>, vector<8x8xf32>
    %cst_42 = arith.constant dense<0xFF800000> : vector<8xf32>
    %130 = vector.multi_reduction <maximumf>, %129, %cst_42 [1] : vector<8x8xf32> to vector<8xf32>
    %131 = vector.shape_cast %130 : vector<8xf32> to vector<8x1xf32>
    %132 = vector.broadcast %131 : vector<8x1xf32> to vector<8x8xf32>
    %133 = arith.subf %129, %132 : vector<8x8xf32>
    %134 = math.exp %133 : vector<8x8xf32>
    %cst_43 = arith.constant dense<0.000000e+00> : vector<8xf32>
    %135 = vector.multi_reduction <add>, %134, %cst_43 [1] : vector<8x8xf32> to vector<8xf32>
    %136 = vector.shape_cast %135 : vector<8xf32> to vector<8x1xf32>
    %137 = tpu.reciprocal %136 {approx = true} : vector<8x1xf32> -> vector<8x1xf32>
    %138 = vector.broadcast %137 : vector<8x1xf32> to vector<8x8xf32>
    %139 = arith.mulf %134, %138 : vector<8x8xf32>
    %140 = arith.truncf %139 : vector<8x8xf32> to vector<8x8xbf16>
    %cst_44 = arith.constant dense<0.000000e+00> : vector<8x32xf32>
    %141 = tpu.matmul %140, %126, %cst_44 {dimension_numbers = #tpu.dot_dimension_numbers<[1], [0], [0], [1], [0, 0, 1, 1], [], []>} : vector<8x8xbf16>, vector<8x32xbf16>, vector<8x32xf32> -> vector<8x32xf32>
    %142 = tpu.concatenate %78, %99, %120, %141 in 1 : vector<8x32xf32>, vector<8x32xf32>, vector<8x32xf32>, vector<8x32xf32> -> vector<8x128xf32>
    %143 = arith.truncf %142 : vector<8x128xf32> to vector<8x128xbf16>
    %c0_45 = arith.constant 0 : index
    %c0_46 = arith.constant 0 : index
    %c0_47 = arith.constant 0 : index
    %144 = vector.load %arg8[%c0_45, %c0_46, %c0_47] : memref<1x128x128xbf16, #tpu.memory_space<vmem>>, vector<1x128x128xbf16>
    %145 = vector.shape_cast %144 : vector<1x128x128xbf16> to vector<128x128xbf16>
    %cst_48 = arith.constant dense<0.000000e+00> : vector<8x128xf32>
    %146 = tpu.matmul %143, %145, %cst_48 {dimension_numbers = #tpu.dot_dimension_numbers<[1], [0], [0], [1], [0, 0, 1, 1], [], []>} : vector<8x128xbf16>, vector<128x128xbf16>, vector<8x128xf32> -> vector<8x128xf32>
    %147 = arith.addf %146, %3 : vector<8x128xf32>
    %c0_49 = arith.constant 0 : index
    %c0_50 = arith.constant 0 : index
    %c0_51 = arith.constant 0 : index
    %148 = vector.load %arg9[%c0_49, %c0_50, %c0_51] : memref<1x1x128xf32, #tpu.memory_space<vmem>>, vector<1x1x128xf32>
    %149 = vector.shape_cast %148 : vector<1x1x128xf32> to vector<1x128xf32>
    %c0_52 = arith.constant 0 : index
    %c0_53 = arith.constant 0 : index
    %c0_54 = arith.constant 0 : index
    %150 = vector.load %arg10[%c0_52, %c0_53, %c0_54] : memref<1x1x128xf32, #tpu.memory_space<vmem>>, vector<1x1x128xf32>
    %151 = vector.shape_cast %150 : vector<1x1x128xf32> to vector<1x128xf32>
    %cst_55 = arith.constant dense<0.000000e+00> : vector<8xf32>
    %152 = vector.multi_reduction <add>, %147, %cst_55 [1] : vector<8x128xf32> to vector<8xf32>
    %153 = vector.shape_cast %152 : vector<8xf32> to vector<8x1xf32>
    %cst_56 = arith.constant 1.280000e+02 : f32
    %154 = vector.broadcast %cst_56 : f32 to vector<8x1xf32>
    %155 = arith.divf %153, %154 : vector<8x1xf32>
    %156 = vector.broadcast %155 : vector<8x1xf32> to vector<8x128xf32>
    %157 = arith.subf %147, %156 : vector<8x128xf32>
    %158 = arith.mulf %157, %157 : vector<8x128xf32>
    %cst_57 = arith.constant dense<0.000000e+00> : vector<8xf32>
    %159 = vector.multi_reduction <add>, %158, %cst_57 [1] : vector<8x128xf32> to vector<8xf32>
    %160 = vector.shape_cast %159 : vector<8xf32> to vector<8x1xf32>
    %cst_58 = arith.constant 1.280000e+02 : f32
    %161 = vector.broadcast %cst_58 : f32 to vector<8x1xf32>
    %162 = arith.divf %160, %161 : vector<8x1xf32>
    %163 = vector.broadcast %155 : vector<8x1xf32> to vector<8x128xf32>
    %164 = arith.subf %147, %163 : vector<8x128xf32>
    %cst_59 = arith.constant 9.99999974E-6 : f32
    %165 = vector.broadcast %cst_59 : f32 to vector<8x1xf32>
    %166 = arith.addf %162, %165 : vector<8x1xf32>
    %167 = math.rsqrt %166 : vector<8x1xf32>
    %168 = vector.broadcast %167 : vector<8x1xf32> to vector<8x128xf32>
    %169 = arith.mulf %164, %168 : vector<8x128xf32>
    %cst_60 = arith.constant 1.000000e+00 : f32
    %170 = vector.broadcast %cst_60 : f32 to vector<1x128xf32>
    %171 = arith.addf %149, %170 : vector<1x128xf32>
    %172 = vector.broadcast %171 : vector<1x128xf32> to vector<8x128xf32>
    %173 = arith.mulf %169, %172 : vector<8x128xf32>
    %174 = vector.broadcast %151 : vector<1x128xf32> to vector<8x128xf32>
    %175 = arith.addf %173, %174 : vector<8x128xf32>
    %176 = arith.truncf %175 : vector<8x128xf32> to vector<8x128xbf16>
    %c0_61 = arith.constant 0 : index
    %c0_62 = arith.constant 0 : index
    %c0_63 = arith.constant 0 : index
    %177 = vector.load %arg11[%c0_61, %c0_62, %c0_63] : memref<1x128x256xbf16, #tpu.memory_space<vmem>>, vector<1x128x256xbf16>
    %178 = vector.shape_cast %177 : vector<1x128x256xbf16> to vector<128x256xbf16>
    %cst_64 = arith.constant dense<0.000000e+00> : vector<8x256xf32>
    %179 = tpu.matmul %176, %178, %cst_64 {dimension_numbers = #tpu.dot_dimension_numbers<[1], [0], [0], [1], [0, 0, 1, 1], [], []>} : vector<8x128xbf16>, vector<128x256xbf16>, vector<8x256xf32> -> vector<8x256xf32>
    %cst_65 = arith.constant 0.000000e+00 : f32
    %180 = vector.broadcast %cst_65 : f32 to vector<8x256xf32>
    %181 = arith.maximumf %179, %180 : vector<8x256xf32>
    %182 = arith.mulf %181, %181 : vector<8x256xf32>
    %183 = arith.truncf %182 : vector<8x256xf32> to vector<8x256xbf16>
    %c0_66 = arith.constant 0 : index
    %c0_67 = arith.constant 0 : index
    %c0_68 = arith.constant 0 : index
    %184 = vector.load %arg12[%c0_66, %c0_67, %c0_68] : memref<1x256x128xbf16, #tpu.memory_space<vmem>>, vector<1x256x128xbf16>
    %185 = vector.shape_cast %184 : vector<1x256x128xbf16> to vector<256x128xbf16>
    %cst_69 = arith.constant dense<0.000000e+00> : vector<8x128xf32>
    %186 = tpu.matmul %183, %185, %cst_69 {dimension_numbers = #tpu.dot_dimension_numbers<[1], [0], [0], [1], [0, 0, 1, 1], [], []>} : vector<8x256xbf16>, vector<256x128xbf16>, vector<8x128xf32> -> vector<8x128xf32>
    %187 = arith.addf %186, %147 : vector<8x128xf32>
    %c0_70 = arith.constant 0 : index
    %c0_71 = arith.constant 0 : index
    %188 = vector.load %arg16[%c0_70, %c0_71] : memref<8x128xf32, #tpu.memory_space<vmem>>, vector<8x128xf32>
    tpu.vector_store %arg16[%c0_70, %c0_71], %187 {strides = array<i32>} : memref<8x128xf32, #tpu.memory_space<vmem>>, vector<8x128xf32>,
    %c1_i32 = arith.constant 1 : i32
    %189 = arith.cmpi eq, %arg0, %c1_i32 : i32
    %190 = arith.extui %189 : i1 to i32
    %c0_i32_72 = arith.constant 0 : i32
    %191 = arith.cmpi ne, %190, %c0_i32_72 : i32
    scf.if %191 {
      %c0_73 = arith.constant 0 : index
      %c0_74 = arith.constant 0 : index
      %192 = vector.load %arg13[%c0_73, %c0_74] : memref<1x128xf32, #tpu.memory_space<vmem>>, vector<1x128xf32>
      %c0_75 = arith.constant 0 : index
      %c0_76 = arith.constant 0 : index
      %193 = vector.load %arg14[%c0_75, %c0_76] : memref<1x128xf32, #tpu.memory_space<vmem>>, vector<1x128xf32>
      %cst_77 = arith.constant dense<0.000000e+00> : vector<8xf32>
      %194 = vector.multi_reduction <add>, %187, %cst_77 [1] : vector<8x128xf32> to vector<8xf32>
      %195 = vector.shape_cast %194 : vector<8xf32> to vector<8x1xf32>
      %cst_78 = arith.constant 1.280000e+02 : f32
      %196 = vector.broadcast %cst_78 : f32 to vector<8x1xf32>
      %197 = arith.divf %195, %196 : vector<8x1xf32>
      %198 = vector.broadcast %197 : vector<8x1xf32> to vector<8x128xf32>
      %199 = arith.subf %187, %198 : vector<8x128xf32>
      %200 = arith.mulf %199, %199 : vector<8x128xf32>
      %cst_79 = arith.constant dense<0.000000e+00> : vector<8xf32>
      %201 = vector.multi_reduction <add>, %200, %cst_79 [1] : vector<8x128xf32> to vector<8xf32>
      %202 = vector.shape_cast %201 : vector<8xf32> to vector<8x1xf32>
      %cst_80 = arith.constant 1.280000e+02 : f32
      %203 = vector.broadcast %cst_80 : f32 to vector<8x1xf32>
      %204 = arith.divf %202, %203 : vector<8x1xf32>
      %205 = vector.broadcast %197 : vector<8x1xf32> to vector<8x128xf32>
      %206 = arith.subf %187, %205 : vector<8x128xf32>
      %cst_81 = arith.constant 9.99999974E-6 : f32
      %207 = vector.broadcast %cst_81 : f32 to vector<8x1xf32>
      %208 = arith.addf %204, %207 : vector<8x1xf32>
      %209 = math.rsqrt %208 : vector<8x1xf32>
      %210 = vector.broadcast %209 : vector<8x1xf32> to vector<8x128xf32>
      %211 = arith.mulf %206, %210 : vector<8x128xf32>
      %cst_82 = arith.constant 1.000000e+00 : f32
      %212 = vector.broadcast %cst_82 : f32 to vector<1x128xf32>
      %213 = arith.addf %192, %212 : vector<1x128xf32>
      %214 = vector.broadcast %213 : vector<1x128xf32> to vector<8x128xf32>
      %215 = arith.mulf %211, %214 : vector<8x128xf32>
      %216 = vector.broadcast %193 : vector<1x128xf32> to vector<8x128xf32>
      %217 = arith.addf %215, %216 : vector<8x128xf32>
      %c0_83 = arith.constant 0 : index
      %c0_84 = arith.constant 0 : index
      %218 = vector.load %arg15[%c0_83, %c0_84] : memref<8x128xf32, #tpu.memory_space<vmem>>, vector<8x128xf32>
      tpu.vector_store %arg15[%c0_83, %c0_84], %217 {strides = array<i32>} : memref<8x128xf32, #tpu.memory_space<vmem>>, vector<8x128xf32>,
    } else {
    }
    return
  }
  func.func @transform_0(%arg0: i32) -> (i32, i32) {
    %c0_i32 = arith.constant 0 : i32
    %c0_i32_0 = arith.constant 0 : i32
    %c0_i32_1 = arith.constant 0 : i32
    return %c0_i32, %c0_i32_0 : i32, i32
  }
  func.func @transform_1(%arg0: i32) -> (i32, i32) {
    %c0_i32 = arith.constant 0 : i32
    %c0_i32_0 = arith.constant 0 : i32
    %c0_i32_1 = arith.constant 0 : i32
    return %c0_i32, %c0_i32_0 : i32, i32
  }
  func.func @transform_2(%arg0: i32) -> (i32, i32) {
    %c0_i32 = arith.constant 0 : i32
    %c0_i32_0 = arith.constant 0 : i32
    %c0_i32_1 = arith.constant 0 : i32
    return %c0_i32, %c0_i32_0 : i32, i32
  }
  func.func @transform_3(%arg0: i32) -> (i32, i32) {
    %c0_i32 = arith.constant 0 : i32
    %c0_i32_0 = arith.constant 0 : i32
    %c0_i32_1 = arith.constant 0 : i32
    return %c0_i32, %c0_i32_0 : i32, i32
  }
  func.func @transform_4(%arg0: i32) -> (i32, i32, i32) {
    %c0_i32 = arith.constant 0 : i32
    %c0_i32_0 = arith.constant 0 : i32
    %c0_i32_1 = arith.constant 0 : i32
    return %arg0, %c0_i32, %c0_i32_0 : i32, i32, i32
  }
  func.func @transform_5(%arg0: i32) -> (i32, i32, i32) {
    %c0_i32 = arith.constant 0 : i32
    %c0_i32_0 = arith.constant 0 : i32
    %c0_i32_1 = arith.constant 0 : i32
    return %arg0, %c0_i32, %c0_i32_0 : i32, i32, i32
  }
  func.func @transform_6(%arg0: i32) -> (i32, i32, i32) {
    %c0_i32 = arith.constant 0 : i32
    %c0_i32_0 = arith.constant 0 : i32
    %c0_i32_1 = arith.constant 0 : i32
    return %arg0, %c0_i32, %c0_i32_0 : i32, i32, i32
  }
  func.func @transform_7(%arg0: i32) -> (i32, i32, i32) {
    %c0_i32 = arith.constant 0 : i32
    %c0_i32_0 = arith.constant 0 : i32
    %c0_i32_1 = arith.constant 0 : i32
    return %arg0, %c0_i32, %c0_i32_0 : i32, i32, i32
  }
  func.func @transform_8(%arg0: i32) -> (i32, i32, i32) {
    %c0_i32 = arith.constant 0 : i32
    %c0_i32_0 = arith.constant 0 : i32
    %c0_i32_1 = arith.constant 0 : i32
    return %arg0, %c0_i32, %c0_i32_0 : i32, i32, i32
  }
  func.func @transform_9(%arg0: i32) -> (i32, i32, i32) {
    %c0_i32 = arith.constant 0 : i32
    %c0_i32_0 = arith.constant 0 : i32
    %c0_i32_1 = arith.constant 0 : i32
    return %arg0, %c0_i32, %c0_i32_0 : i32, i32, i32
  }
  func.func @transform_10(%arg0: i32) -> (i32, i32, i32) {
    %c0_i32 = arith.constant 0 : i32
    %c0_i32_0 = arith.constant 0 : i32
    %c0_i32_1 = arith.constant 0 : i32
    return %arg0, %c0_i32, %c0_i32_0 : i32, i32, i32
  }
  func.func @transform_11(%arg0: i32) -> (i32, i32, i32) {
    %c0_i32 = arith.constant 0 : i32
    %c0_i32_0 = arith.constant 0 : i32
    %c0_i32_1 = arith.constant 0 : i32
    return %arg0, %c0_i32, %c0_i32_0 : i32, i32, i32
  }
  func.func @transform_12(%arg0: i32) -> (i32, i32) {
    %c0_i32 = arith.constant 0 : i32
    %c0_i32_0 = arith.constant 0 : i32
    %c0_i32_1 = arith.constant 0 : i32
    return %c0_i32, %c0_i32_0 : i32, i32
  }
  func.func @transform_13(%arg0: i32) -> (i32, i32) {
    %c0_i32 = arith.constant 0 : i32
    %c0_i32_0 = arith.constant 0 : i32
    %c0_i32_1 = arith.constant 0 : i32
    return %c0_i32, %c0_i32_0 : i32, i32
  }
  func.func @transform_14(%arg0: i32) -> (i32, i32) {
    %c0_i32 = arith.constant 0 : i32
    %c0_i32_0 = arith.constant 0 : i32
    %c0_i32_1 = arith.constant 0 : i32
    return %c0_i32, %c0_i32_0 : i32, i32
  }
}

</mosaic_0001>

<llo_original>
// kernel: tile.14
$region0: #{tile.14}
  %s0 = inlined_call_operand.vmem [shape: f32[8,4,32], index: 0, kind: input, shape index: {}]
  %s1 = inlined_call_operand.vmem [shape: f32[8,128], index: 1, kind: output, shape index: {}]
  $region1: #{tile.14} parent=0
    #allocation0 [shape = 'u8[32768]{0}', space=vmem, size = 0x8000, scoped, tag = 'scoped mem for input reshape']
    %s3 = sshllo.u32 0, 4
    %s4 = smul.addr 4, 7
    %s5 = scalar_lea.vmem %s0, %s4
    %v6 = vld [vmem:[%s5] sm:%s3]
    %s7 = scalar_lea.vmem [#allocation0], 56
    %8 = vst [vmem:[%s7] sm:%s3] %v6
    %s9 = smul.addr 4, 6
    %s10 = scalar_lea.vmem %s0, %s9
    %v11 = vld [vmem:[%s10] sm:%s3]
    %s12 = scalar_lea.vmem [#allocation0], 48
    %13 = vst [vmem:[%s12] sm:%s3] %v11
    %s14 = smul.addr 4, 5
    %s15 = scalar_lea.vmem %s0, %s14
    %v16 = vld [vmem:[%s15] sm:%s3]
    %s17 = scalar_lea.vmem [#allocation0], 40
    %18 = vst [vmem:[%s17] sm:%s3] %v16
    %s19 = smul.addr 4, 4
    %s20 = scalar_lea.vmem %s0, %s19
    %v21 = vld [vmem:[%s20] sm:%s3]
    %s22 = scalar_lea.vmem [#allocation0], 32
    %23 = vst [vmem:[%s22] sm:%s3] %v21
    %s24 = smul.addr 4, 3
    %s25 = scalar_lea.vmem %s0, %s24
    %v26 = vld [vmem:[%s25] sm:%s3]
    %s27 = scalar_lea.vmem [#allocation0], 24
    %28 = vst [vmem:[%s27] sm:%s3] %v26
    %s29 = smul.addr 4, 2
    %s30 = scalar_lea.vmem %s0, %s29
    %v31 = vld [vmem:[%s30] sm:%s3]
    %s32 = scalar_lea.vmem [#allocation0], 16
    %33 = vst [vmem:[%s32] sm:%s3] %v31
    %s34 = scalar_lea.vmem %s0, 4
    %v35 = vld [vmem:[%s34] sm:%s3]
    %s36 = scalar_lea.vmem [#allocation0], 8
    %37 = vst [vmem:[%s36] sm:%s3] %v35
    %v38 = vld [vmem:[%s0] sm:%s3]
    %39 = vst [vmem:[#allocation0] sm:%s3] %v38
    %v40 = vld [vmem:[#allocation0] ss:$8 sm:$0xf]
    %v41 = vld [vmem:[#allocation0] ss:$8 sm:$0xf0]
    %vm42 = vcmask 1047556
    %v43 = vsel %vm42, %v41, %v40
    %vm44 = vcmask 261120
    %45 = vst.msk [vmem:[%s1] sm:$0xff] %vm44, %v43
    %s46 = scalar_lea.vmem [#allocation0], 3
    %v47 = vld [vmem:[%s46] ss:$8 sm:$0xf]
    %s48 = scalar_lea.vmem [#allocation0], 3
    %v49 = vld [vmem:[%s48] ss:$8 sm:$0xf0]
    %vm50 = vcmask 1047556
    %v51 = vsel %vm50, %v49, %v47
    %52 = vrot.lane.b32.xlu0 %v51, 96
    %v53 = vpop.permute.xlu0 %52
    %vm54 = vcmask 1048320
    %55 = vst.msk [vmem:[%s1] sm:$0xff] %vm54, %v53
    %s56 = scalar_lea.vmem [#allocation0], 2
    %v57 = vld [vmem:[%s56] ss:$8 sm:$0xf]
    %s58 = scalar_lea.vmem [#allocation0], 2
    %v59 = vld [vmem:[%s58] ss:$8 sm:$0xf0]
    %vm60 = vcmask 1047556
    %v61 = vsel %vm60, %v59, %v57
    %62 = vrot.lane.b32.xlu0 %v61, 64
    %v63 = vpop.permute.xlu0 %62
    %vm64 = vcmask 785920
    %65 = vst.msk [vmem:[%s1] sm:$0xff] %vm64, %v63
    %s66 = scalar_lea.vmem [#allocation0], 1
    %v67 = vld [vmem:[%s66] ss:$8 sm:$0xf]
    %s68 = scalar_lea.vmem [#allocation0], 1
    %v69 = vld [vmem:[%s68] ss:$8 sm:$0xf0]
    %vm70 = vcmask 1047556
    %v71 = vsel %vm70, %v69, %v67
    %72 = vrot.lane.b32.xlu0 %v71, 32
    %v73 = vpop.permute.xlu0 %72
    %vm74 = vcmask 523520
    %75 = vst.msk [vmem:[%s1] sm:$0xff] %vm74, %v73

// kernel: nemotron_forward.1
$region0: #{nemotron_forward.1}
  #allocation0 [shape = 'u32[]', space=smem, size = 0x4, offset = 0x4, fixed_abs, tag = 'smem constant byte address 0x4 - core index']
  #allocation1 [shape = 'u32[144,128]{1,0:T(1,128)}', space=vmem, size = 0x12000, scoped, tag = 'internal scratch']
  #allocation2 [shape = 'f32[8,128]{1,0:T(8,128)}', space=vmem, size = 0x1000, scoped, tag = 'scratch operand']
  %s0 = inlined_call_operand.vmem [shape: f32[8,128], index: 0, kind: input, shape index: {}]
  %s1 = inlined_call_operand.vmem [shape: f32[8,128], index: 1, kind: input, shape index: {}]
  %s2 = inlined_call_operand.vmem [shape: f32[8,128], index: 2, kind: input, shape index: {}]
  %s3 = inlined_call_operand.vmem [shape: bf16[128,128], index: 3, kind: input, shape index: {}]
  %s4 = inlined_call_operand.vmem [shape: f32[2,1,128], index: 4, kind: input, shape index: {}]
  %s5 = inlined_call_operand.vmem [shape: f32[2,1,128], index: 5, kind: input, shape index: {}]
  %s6 = inlined_call_operand.vmem [shape: bf16[2,128,256], index: 6, kind: input, shape index: {}]
  %s7 = inlined_call_operand.hbm [shape: bf16[2,128,128], index: 7, kind: input, shape index: {}]
  %s8 = inlined_call_operand.vmem [shape: f32[2,1,128], index: 8, kind: input, shape index: {}]
  %s9 = inlined_call_operand.vmem [shape: f32[2,1,128], index: 9, kind: input, shape index: {}]
  %s10 = inlined_call_operand.hbm [shape: bf16[2,128,256], index: 10, kind: input, shape index: {}]
  %s11 = inlined_call_operand.hbm [shape: bf16[2,256,128], index: 11, kind: input, shape index: {}]
  %s12 = inlined_call_operand.vmem [shape: f32[1,128], index: 12, kind: input, shape index: {}]
  %s13 = inlined_call_operand.vmem [shape: f32[1,128], index: 13, kind: input, shape index: {}]
  %s14 = inlined_call_operand.hbm [shape: f32[8,128], index: 14, kind: output, shape index: {}]
  %s15 = sld [smem:[#allocation0]]
  $region109: #{nemotron_forward.1} parent=0
    _
  %s17 = ssub.s32 1, %s15
  %s18 = scalar_select 0, %s17, %s15
  $region1: #{nemotron_forward.1} parent=0
    #allocation3 [shape = 'u8[65536]{0}', space=vmem, size = 0x10000, scoped, tag = 'input window, operand 7']
    #allocation4 [shape = 's32[2]{0}', space=sflag, size = 0x8, scoped, tag = 'scoped memory for nemotron_forward.1']
    #allocation5 [shape = 's32[2]{0}', space=sflag, size = 0x8, scoped, tag = 'scoped memory for nemotron_forward.1']
    #allocation6 [shape = 'u8[131072]{0}', space=vmem, size = 0x20000, scoped, tag = 'input window, operand 10']
    #allocation7 [shape = 's32[2]{0}', space=sflag, size = 0x8, scoped, tag = 'scoped memory for nemotron_forward.1']
    #allocation8 [shape = 'u8[131072]{0}', space=vmem, size = 0x20000, scoped, tag = 'input window, operand 11']
    #allocation9 [shape = 'u8[4096]{0}', space=vmem, size = 0x1000, scoped, tag = 'output window, operand 0, single buffered']
    %19 = vsyncpa [#allocation4], 0
    %s20 = scalar_lea.sflag [#allocation4], 1
    %21 = vsyncpa %s20, 0
    %22 = vsyncpa [#allocation7], 0
    %s23 = scalar_lea.sflag [#allocation7], 1
    %24 = vsyncpa %s23, 0
    %25 = vsyncpa [#allocation5], 0
    loop: start=0, step=1, limit=4
    $region2: #{nemotron_forward.1} parent=1 // loop_pre_header
      _
    $region3: #{nemotron_forward.1} parent=1 // loop_header
      %s27 = sphi 0, %s31
      %p28 = scmp.ge.s32.totalorder %s27, 4
      %s35 = sphi 0, %s35
      %s37 = sphi 0, %s35
      %s38 = sphi 0, %s37
      %s52 = sphi 0, %s38
      %s56 = sphi 0, %s56
      %s58 = sphi 0, %s56
      %s59 = sphi 0, %s58
      %s73 = sphi 0, %s59
      %s77 = sphi 0, %s77
      %s79 = sphi 0, %s77
      %s80 = sphi 0, %s79
      %s94 = sphi 0, %s80
      %s98 = sphi 0, %s98
      %s100 = sphi 0, %s98
      %s101 = sphi 0, %s100
      %s115 = sphi 0, %s101
      %s121 = sphi 0, %s123
      %s124 = sphi 0, %s121
      %s125 = sphi 0, %s124
      %s141 = sphi 0, %s125
      %s147 = sphi 0, %s149
      %s150 = sphi 0, %s147
      %s151 = sphi 0, %s150
      %s167 = sphi 0, %s151
      %s173 = sphi 0, %s175
      %s176 = sphi 0, %s173
      %s177 = sphi 0, %s176
      %s193 = sphi 0, %s177
      %s199 = sphi 0, %s201
      %s202 = sphi 0, %s199
      %s203 = sphi 0, %s202
      %s219 = sphi 0, %s203
      %s225 = sphi 0, %s227
      %s228 = sphi 0, %s225
      %s229 = sphi 0, %s228
      %s245 = sphi 0, %s229
      %s251 = sphi 0, %s253
      %s254 = sphi 0, %s251
      %s255 = sphi 0, %s254
      %s271 = sphi 0, %s255
      %s277 = sphi 0, %s279
      %s280 = sphi 0, %s277
      %s281 = sphi 0, %s280
      %s297 = sphi 0, %s281
      %s303 = sphi 0, %s305
      %s306 = sphi 0, %s303
      %s307 = sphi 0, %s306
      %s323 = sphi 0, %s307
      %s327 = sphi 0, %s327
      %s329 = sphi 0, %s327
      %s330 = sphi 0, %s329
      %s344 = sphi 0, %s330
      %s348 = sphi 0, %s348
      %s350 = sphi 0, %s348
      %s351 = sphi 0, %s350
      %s365 = sphi 0, %s351
      %s369 = sphi 0, %s369
      %s371 = sphi 0, %s369
      %s372 = sphi 0, %s371
      %s386 = sphi 0, %s372
    $region4: #{nemotron_forward.1} parent=1 // loop_header_branch
      %30 = sbr.rel (%p28) target = $region8
    $region5: #{nemotron_forward.1} parent=1 // loop_body
      %s32 = ssub.s32 %s27, 1
      %s33 = ssub.s32 %s27, 2
      %s34 = sadd.s32 %s27, 1
      %s36 = sadd.s32 %s35, 1
      %p39 = scmp.eq.s32.totalorder %s27, 1
      %p40 = scmp.ne.s32.totalorder %s35, %s37
      %p41 = scmp.eq.s32.totalorder %s27, 0
      %p42 = por %p40, %p41
      %p43 = scmp.ne.s32.totalorder %s35, %s37
      %p44 = scmp.eq.s32.totalorder %s32, 1
      %p45 = por %p43, %p44
      %p46 = scmp.ne.s32.totalorder %s37, %s38
      %p47 = scmp.eq.s32.totalorder %s32, 0
      %p48 = por %p46, %p47
      %p49 = scmp.ne.s32.totalorder %s37, %s38
      %p50 = scmp.eq.s32.totalorder %s33, 1
      %p51 = por %p49, %p50
      %p53 = scmp.ne.s32.totalorder %s38, %s52
      %p54 = scmp.eq.s32.totalorder %s33, 0
      %p55 = por %p53, %p54
      %s57 = sadd.s32 %s56, 1
      %p60 = scmp.eq.s32.totalorder %s27, 1
      %p61 = scmp.ne.s32.totalorder %s56, %s58
      %p62 = scmp.eq.s32.totalorder %s27, 0
      %p63 = por %p61, %p62
      %p64 = scmp.ne.s32.totalorder %s56, %s58
      %p65 = scmp.eq.s32.totalorder %s32, 1
      %p66 = por %p64, %p65
      %p67 = scmp.ne.s32.totalorder %s58, %s59
      %p68 = scmp.eq.s32.totalorder %s32, 0
      %p69 = por %p67, %p68
      %p70 = scmp.ne.s32.totalorder %s58, %s59
      %p71 = scmp.eq.s32.totalorder %s33, 1
      %p72 = por %p70, %p71
      %p74 = scmp.ne.s32.totalorder %s59, %s73
      %p75 = scmp.eq.s32.totalorder %s33, 0
      %p76 = por %p74, %p75
      %s78 = sadd.s32 %s77, 1
      %p81 = scmp.eq.s32.totalorder %s27, 1
      %p82 = scmp.ne.s32.totalorder %s77, %s79
      %p83 = scmp.eq.s32.totalorder %s27, 0
      %p84 = por %p82, %p83
      %p85 = scmp.ne.s32.totalorder %s77, %s79
      %p86 = scmp.eq.s32.totalorder %s32, 1
      %p87 = por %p85, %p86
      %p88 = scmp.ne.s32.totalorder %s79, %s80
      %p89 = scmp.eq.s32.totalorder %s32, 0
      %p90 = por %p88, %p89
      %p91 = scmp.ne.s32.totalorder %s79, %s80
      %p92 = scmp.eq.s32.totalorder %s33, 1
      %p93 = por %p91, %p92
      %p95 = scmp.ne.s32.totalorder %s80, %s94
      %p96 = scmp.eq.s32.totalorder %s33, 0
      %p97 = por %p95, %p96
      %s99 = sadd.s32 %s98, 1
      %p102 = scmp.eq.s32.totalorder %s27, 1
      %p103 = scmp.ne.s32.totalorder %s98, %s100
      %p104 = scmp.eq.s32.totalorder %s27, 0
      %p105 = por %p103, %p104
      %p106 = scmp.ne.s32.totalorder %s98, %s100
      %p107 = scmp.eq.s32.totalorder %s32, 1
      %p108 = por %p106, %p107
      %p109 = scmp.ne.s32.totalorder %s100, %s101
      %p110 = scmp.eq.s32.totalorder %s32, 0
      %p111 = por %p109, %p110
      %p112 = scmp.ne.s32.totalorder %s100, %s101
      %p113 = scmp.eq.s32.totalorder %s33, 1
      %p114 = por %p112, %p113
      %p116 = scmp.ne.s32.totalorder %s101, %s115
      %p117 = scmp.eq.s32.totalorder %s33, 0
      %p118 = por %p116, %p117
      %s119 = ssub.s32 %s27, %s34
      %p120 = scmp.eq.s32.totalorder %s119, 0
      %s122 = sadd.s32 %s121, 1
      %s123 = scalar_select %p120, %s121, %s122
      %p126 = pneg %p120
      %p127 = scmp.eq.s32.totalorder %s27, 1
      %p128 = por %p126, %p127
      %p129 = scmp.ne.s32.totalorder %s121, %s124
      %p130 = scmp.eq.s32.totalorder %s27, 0
      %p131 = por %p129, %p130
      %p132 = scmp.ne.s32.totalorder %s121, %s124
      %p133 = scmp.eq.s32.totalorder %s32, 1
      %p134 = por %p132, %p133
      %p135 = scmp.ne.s32.totalorder %s124, %s125
      %p136 = scmp.eq.s32.totalorder %s32, 0
      %p137 = por %p135, %p136
      %p138 = scmp.ne.s32.totalorder %s124, %s125
      %p139 = scmp.eq.s32.totalorder %s33, 1
      %p140 = por %p138, %p139
      %p142 = scmp.ne.s32.totalorder %s125, %s141
      %p143 = scmp.eq.s32.totalorder %s33, 0
      %p144 = por %p142, %p143
      %s145 = ssub.s32 %s27, %s34
      %p146 = scmp.eq.s32.totalorder %s145, 0
      %s148 = sadd.s32 %s147, 1
      %s149 = scalar_select %p146, %s147, %s148
      %p152 = pneg %p146
      %p153 = scmp.eq.s32.totalorder %s27, 1
      %p154 = por %p152, %p153
      %p155 = scmp.ne.s32.totalorder %s147, %s150
      %p156 = scmp.eq.s32.totalorder %s27, 0
      %p157 = por %p155, %p156
      %p158 = scmp.ne.s32.totalorder %s147, %s150
      %p159 = scmp.eq.s32.totalorder %s32, 1
      %p160 = por %p158, %p159
      %p161 = scmp.ne.s32.totalorder %s150, %s151
      %p162 = scmp.eq.s32.totalorder %s32, 0
      %p163 = por %p161, %p162
      %p164 = scmp.ne.s32.totalorder %s150, %s151
      %p165 = scmp.eq.s32.totalorder %s33, 1
      %p166 = por %p164, %p165
      %p168 = scmp.ne.s32.totalorder %s151, %s167
      %p169 = scmp.eq.s32.totalorder %s33, 0
      %p170 = por %p168, %p169
      %s171 = ssub.s32 %s27, %s34
      %p172 = scmp.eq.s32.totalorder %s171, 0
      %s174 = sadd.s32 %s173, 1
      %s175 = scalar_select %p172, %s173, %s174
      %p178 = pneg %p172
      %p179 = scmp.eq.s32.totalorder %s27, 1
      %p180 = por %p178, %p179
      %p181 = scmp.ne.s32.totalorder %s173, %s176
      %p182 = scmp.eq.s32.totalorder %s27, 0
      %p183 = por %p181, %p182
      %p184 = scmp.ne.s32.totalorder %s173, %s176
      %p185 = scmp.eq.s32.totalorder %s32, 1
      %p186 = por %p184, %p185
      %p187 = scmp.ne.s32.totalorder %s176, %s177
      %p188 = scmp.eq.s32.totalorder %s32, 0
      %p189 = por %p187, %p188
      %p190 = scmp.ne.s32.totalorder %s176, %s177
      %p191 = scmp.eq.s32.totalorder %s33, 1
      %p192 = por %p190, %p191
      %p194 = scmp.ne.s32.totalorder %s177, %s193
      %p195 = scmp.eq.s32.totalorder %s33, 0
      %p196 = por %p194, %p195
      %s197 = ssub.s32 %s27, %s34
      %p198 = scmp.eq.s32.totalorder %s197, 0
      %s200 = sadd.s32 %s199, 1
      %s201 = scalar_select %p198, %s199, %s200
      %p204 = pneg %p198
      %p205 = scmp.eq.s32.totalorder %s27, 1
      %p206 = por %p204, %p205
      %p207 = scmp.ne.s32.totalorder %s199, %s202
      %p208 = scmp.eq.s32.totalorder %s27, 0
      %p209 = por %p207, %p208
      %p210 = scmp.ne.s32.totalorder %s199, %s202
      %p211 = scmp.eq.s32.totalorder %s32, 1
      %p212 = por %p210, %p211
      %p213 = scmp.ne.s32.totalorder %s202, %s203
      %p214 = scmp.eq.s32.totalorder %s32, 0
      %p215 = por %p213, %p214
      %p216 = scmp.ne.s32.totalorder %s202, %s203
      %p217 = scmp.eq.s32.totalorder %s33, 1
      %p218 = por %p216, %p217
      %p220 = scmp.ne.s32.totalorder %s203, %s219
      %p221 = scmp.eq.s32.totalorder %s33, 0
      %p222 = por %p220, %p221
      %s223 = ssub.s32 %s27, %s34
      %p224 = scmp.eq.s32.totalorder %s223, 0
      %s226 = sadd.s32 %s225, 1
      %s227 = scalar_select %p224, %s225, %s226
      %p230 = pneg %p224
      %p231 = scmp.eq.s32.totalorder %s27, 1
      %p232 = por %p230, %p231
      %p233 = scmp.ne.s32.totalorder %s225, %s228
      %p234 = scmp.eq.s32.totalorder %s27, 0
      %p235 = por %p233, %p234
      %p236 = scmp.ne.s32.totalorder %s225, %s228
      %p237 = scmp.eq.s32.totalorder %s32, 1
      %p238 = por %p236, %p237
      %p239 = scmp.ne.s32.totalorder %s228, %s229
      %p240 = scmp.eq.s32.totalorder %s32, 0
      %p241 = por %p239, %p240
      %p242 = scmp.ne.s32.totalorder %s228, %s229
      %p243 = scmp.eq.s32.totalorder %s33, 1
      %p244 = por %p242, %p243
      %p246 = scmp.ne.s32.totalorder %s229, %s245
      %p247 = scmp.eq.s32.totalorder %s33, 0
      %p248 = por %p246, %p247
      %s249 = ssub.s32 %s27, %s34
      %p250 = scmp.eq.s32.totalorder %s249, 0
      %s252 = sadd.s32 %s251, 1
      %s253 = scalar_select %p250, %s251, %s252
      %p256 = pneg %p250
      %p257 = scmp.eq.s32.totalorder %s27, 1
      %p258 = por %p256, %p257
      %p259 = scmp.ne.s32.totalorder %s251, %s254
      %p260 = scmp.eq.s32.totalorder %s27, 0
      %p261 = por %p259, %p260
      %p262 = scmp.ne.s32.totalorder %s251, %s254
      %p263 = scmp.eq.s32.totalorder %s32, 1
      %p264 = por %p262, %p263
      %p265 = scmp.ne.s32.totalorder %s254, %s255
      %p266 = scmp.eq.s32.totalorder %s32, 0
      %p267 = por %p265, %p266
      %p268 = scmp.ne.s32.totalorder %s254, %s255
      %p269 = scmp.eq.s32.totalorder %s33, 1
      %p270 = por %p268, %p269
      %p272 = scmp.ne.s32.totalorder %s255, %s271
      %p273 = scmp.eq.s32.totalorder %s33, 0
      %p274 = por %p272, %p273
      %s275 = ssub.s32 %s27, %s34
      %p276 = scmp.eq.s32.totalorder %s275, 0
      %s278 = sadd.s32 %s277, 1
      %s279 = scalar_select %p276, %s277, %s278
      %p282 = pneg %p276
      %p283 = scmp.eq.s32.totalorder %s27, 1
      %p284 = por %p282, %p283
      %p285 = scmp.ne.s32.totalorder %s277, %s280
      %p286 = scmp.eq.s32.totalorder %s27, 0
      %p287 = por %p285, %p286
      %p288 = scmp.ne.s32.totalorder %s277, %s280
      %p289 = scmp.eq.s32.totalorder %s32, 1
      %p290 = por %p288, %p289
      %p291 = scmp.ne.s32.totalorder %s280, %s281
      %p292 = scmp.eq.s32.totalorder %s32, 0
      %p293 = por %p291, %p292
      %p294 = scmp.ne.s32.totalorder %s280, %s281
      %p295 = scmp.eq.s32.totalorder %s33, 1
      %p296 = por %p294, %p295
      %p298 = scmp.ne.s32.totalorder %s281, %s297
      %p299 = scmp.eq.s32.totalorder %s33, 0
      %p300 = por %p298, %p299
      %s301 = ssub.s32 %s27, %s34
      %p302 = scmp.eq.s32.totalorder %s301, 0
      %s304 = sadd.s32 %s303, 1
      %s305 = scalar_select %p302, %s303, %s304
      %p308 = pneg %p302
      %p309 = scmp.eq.s32.totalorder %s27, 1
      %p310 = por %p308, %p309
      %p311 = scmp.ne.s32.totalorder %s303, %s306
      %p312 = scmp.eq.s32.totalorder %s27, 0
      %p313 = por %p311, %p312
      %p314 = scmp.ne.s32.totalorder %s303, %s306
      %p315 = scmp.eq.s32.totalorder %s32, 1
      %p316 = por %p314, %p315
      %p317 = scmp.ne.s32.totalorder %s306, %s307
      %p318 = scmp.eq.s32.totalorder %s32, 0
      %p319 = por %p317, %p318
      %p320 = scmp.ne.s32.totalorder %s306, %s307
      %p321 = scmp.eq.s32.totalorder %s33, 1
      %p322 = por %p320, %p321
      %p324 = scmp.ne.s32.totalorder %s307, %s323
      %p325 = scmp.eq.s32.totalorder %s33, 0
      %p326 = por %p324, %p325
      %s328 = sadd.s32 %s327, 1
      %p331 = scmp.eq.s32.totalorder %s27, 1
      %p332 = scmp.ne.s32.totalorder %s327, %s329
      %p333 = scmp.eq.s32.totalorder %s27, 0
      %p334 = por %p332, %p333
      %p335 = scmp.ne.s32.totalorder %s327, %s329
      %p336 = scmp.eq.s32.totalorder %s32, 1
      %p337 = por %p335, %p336
      %p338 = scmp.ne.s32.totalorder %s329, %s330
      %p339 = scmp.eq.s32.totalorder %s32, 0
      %p340 = por %p338, %p339
      %p341 = scmp.ne.s32.totalorder %s329, %s330
      %p342 = scmp.eq.s32.totalorder %s33, 1
      %p343 = por %p341, %p342
      %p345 = scmp.ne.s32.totalorder %s330, %s344
      %p346 = scmp.eq.s32.totalorder %s33, 0
      %p347 = por %p345, %p346
      %s349 = sadd.s32 %s348, 1
      %p352 = scmp.eq.s32.totalorder %s27, 1
      %p353 = scmp.ne.s32.totalorder %s348, %s350
      %p354 = scmp.eq.s32.totalorder %s27, 0
      %p355 = por %p353, %p354
      %p356 = scmp.ne.s32.totalorder %s348, %s350
      %p357 = scmp.eq.s32.totalorder %s32, 1
      %p358 = por %p356, %p357
      %p359 = scmp.ne.s32.totalorder %s350, %s351
      %p360 = scmp.eq.s32.totalorder %s32, 0
      %p361 = por %p359, %p360
      %p362 = scmp.ne.s32.totalorder %s350, %s351
      %p363 = scmp.eq.s32.totalorder %s33, 1
      %p364 = por %p362, %p363
      %p366 = scmp.ne.s32.totalorder %s351, %s365
      %p367 = scmp.eq.s32.totalorder %s33, 0
      %p368 = por %p366, %p367
      %s370 = sadd.s32 %s369, 1
      %p373 = scmp.eq.s32.totalorder %s27, 1
      %p374 = scmp.ne.s32.totalorder %s369, %s371
      %p375 = scmp.eq.s32.totalorder %s27, 0
      %p376 = por %p374, %p375
      %p377 = scmp.ne.s32.totalorder %s369, %s371
      %p378 = scmp.eq.s32.totalorder %s32, 1
      %p379 = por %p377, %p378
      %p380 = scmp.ne.s32.totalorder %s371, %s372
      %p381 = scmp.eq.s32.totalorder %s32, 0
      %p382 = por %p380, %p381
      %p383 = scmp.ne.s32.totalorder %s371, %s372
      %p384 = scmp.eq.s32.totalorder %s33, 1
      %p385 = por %p383, %p384
      %p387 = scmp.ne.s32.totalorder %s372, %s386
      %p388 = scmp.eq.s32.totalorder %s33, 0
      %p389 = por %p387, %p388
      %p390 = scmp.le.s32.totalorder 1, %s27
      %p391 = scmp.lt.s32.totalorder %s27, 3
      %p392 = pnand %p390, %p391
      %p393 = pneg %p392
      // Predicated region
      $region9: #{nemotron_forward.1} parent=5 // pred_check
        _
      $region10: #{nemotron_forward.1} parent=5 // pred_check_branch
        %395 = sbr.rel (%p392) target = $region12
      $region11: #{nemotron_forward.1} parent=5 // pred_region
        %s396 = ssub.s32 %s27, 1
        // Predicated region
        $region13: #{nemotron_forward.1} parent=11 // pred_check
          %p397 = pneg %p48
        $region14: #{nemotron_forward.1} parent=11 // pred_check_branch
          %399 = sbr.rel (%p397) target = $region16
        $region15: #{nemotron_forward.1} parent=11 // pred_region
          _
        $region16: #{nemotron_forward.1} parent=11 // pred_fallthru
          _
        // Predicated region
        $region17: #{nemotron_forward.1} parent=11 // pred_check
          %p400 = pneg %p69
        $region18: #{nemotron_forward.1} parent=11 // pred_check_branch
          %402 = sbr.rel (%p400) target = $region20
        $region19: #{nemotron_forward.1} parent=11 // pred_region
          _
        $region20: #{nemotron_forward.1} parent=11 // pred_fallthru
          _
        // Predicated region
        $region21: #{nemotron_forward.1} parent=11 // pred_check
          %p403 = pneg %p90
        $region22: #{nemotron_forward.1} parent=11 // pred_check_branch
          %405 = sbr.rel (%p403) target = $region24
        $region23: #{nemotron_forward.1} parent=11 // pred_region
          _
        $region24: #{nemotron_forward.1} parent=11 // pred_fallthru
          _
        // Predicated region
        $region25: #{nemotron_forward.1} parent=11 // pred_check
          %p406 = pneg %p111
        $region26: #{nemotron_forward.1} parent=11 // pred_check_branch
          %408 = sbr.rel (%p406) target = $region28
        $region27: #{nemotron_forward.1} parent=11 // pred_region
          _
        $region28: #{nemotron_forward.1} parent=11 // pred_fallthru
          _
        // Predicated region
        $region29: #{nemotron_forward.1} parent=11 // pred_check
          %p409 = pneg %p340
        $region30: #{nemotron_forward.1} parent=11 // pred_check_branch
          %411 = sbr.rel (%p409) target = $region32
        $region31: #{nemotron_forward.1} parent=11 // pred_region
          _
        $region32: #{nemotron_forward.1} parent=11 // pred_fallthru
          _
        // Predicated region
        $region33: #{nemotron_forward.1} parent=11 // pred_check
          %p412 = pneg %p361
        $region34: #{nemotron_forward.1} parent=11 // pred_check_branch
          %414 = sbr.rel (%p412) target = $region36
        $region35: #{nemotron_forward.1} parent=11 // pred_region
          _
        $region36: #{nemotron_forward.1} parent=11 // pred_fallthru
          _
      $region12: #{nemotron_forward.1} parent=5 // pred_fallthru
        _
      %p415 = scmp.lt.s32.totalorder %s27, 2
      // Predicated region
      $region37: #{nemotron_forward.1} parent=5 // pred_check
        %p416 = pneg %p415
      $region38: #{nemotron_forward.1} parent=5 // pred_check_branch
        %418 = sbr.rel (%p416) target = $region40
      $region39: #{nemotron_forward.1} parent=5 // pred_region
        // Predicated region
        $region41: #{nemotron_forward.1} parent=39 // pred_check
          %p419 = pneg %p131
        $region42: #{nemotron_forward.1} parent=39 // pred_check_branch
          %421 = sbr.rel (%p419) target = $region44
        $region43: #{nemotron_forward.1} parent=39 // pred_region
          %p422 = scmp.lt.s32.totalorder %s27, 1
          %s423 = scalar_select %p422, %s27, 1
          %s424 = scalar_lea.vmem %s4, %s423
        $region44: #{nemotron_forward.1} parent=39 // pred_fallthru
          _
        // Predicated region
        $region45: #{nemotron_forward.1} parent=39 // pred_check
          %p425 = pneg %p157
        $region46: #{nemotron_forward.1} parent=39 // pred_check_branch
          %427 = sbr.rel (%p425) target = $region48
        $region47: #{nemotron_forward.1} parent=39 // pred_region
          %p428 = scmp.lt.s32.totalorder %s27, 1
          %s429 = scalar_select %p428, %s27, 1
          %s430 = scalar_lea.vmem %s5, %s429
        $region48: #{nemotron_forward.1} parent=39 // pred_fallthru
          _
        // Predicated region
        $region49: #{nemotron_forward.1} parent=39 // pred_check
          %p431 = pneg %p183
        $region50: #{nemotron_forward.1} parent=39 // pred_check_branch
          %433 = sbr.rel (%p431) target = $region52
        $region51: #{nemotron_forward.1} parent=39 // pred_region
          %p434 = scmp.lt.s32.totalorder %s27, 1
          %s435 = scalar_select %p434, %s27, 1
          %s436 = smul.addr %s435, 32
          %s437 = smul.addr %s436, 4
          %s438 = scalar_lea.vmem %s6, %s437
        $region52: #{nemotron_forward.1} parent=39 // pred_fallthru
          _
        // Predicated region
        $region53: #{nemotron_forward.1} parent=39 // pred_check
          %p439 = pneg %p209
        $region54: #{nemotron_forward.1} parent=39 // pred_check_branch
          %441 = sbr.rel (%p439) target = $region56
        $region55: #{nemotron_forward.1} parent=39 // pred_region
          %s442 = sand.u32 %s199, 1
          %s443 = scalar_lea.sflag [#allocation4], %s442
          %s444 = sand.u32 %s199, 1
          %s445 = smul.addr %s444, 64
          %s446 = scalar_lea.vmem [#allocation3], %s445
          %s448 = ssub.s32 1024, 1024
          %449 = vsyncadd %s443, %s448
          %s450 = smul.addr %s27, 16
          %s451 = smul.addr %s450, 64
          %s452 = scalar_lea.hbm %s7, %s451
          %s453 = sshll.u32 %s446, 4
          %s454 = int_to_ptr.vmem [resolvable:$true] %s453
          %459 = dma.hbm_to_vmem [thread:$0]  %s452, 1024, %s454, %s443, 64, 64, 4
        $region56: #{nemotron_forward.1} parent=39 // pred_fallthru
          _
        // Predicated region
        $region57: #{nemotron_forward.1} parent=39 // pred_check
          %p460 = pneg %p235
        $region58: #{nemotron_forward.1} parent=39 // pred_check_branch
          %462 = sbr.rel (%p460) target = $region60
        $region59: #{nemotron_forward.1} parent=39 // pred_region
          %p463 = scmp.lt.s32.totalorder %s27, 1
          %s464 = scalar_select %p463, %s27, 1
          %s465 = scalar_lea.vmem %s8, %s464
        $region60: #{nemotron_forward.1} parent=39 // pred_fallthru
          _
        // Predicated region
        $region61: #{nemotron_forward.1} parent=39 // pred_check
          %p466 = pneg %p261
        $region62: #{nemotron_forward.1} parent=39 // pred_check_branch
          %468 = sbr.rel (%p466) target = $region64
        $region63: #{nemotron_forward.1} parent=39 // pred_region
          %p469 = scmp.lt.s32.totalorder %s27, 1
          %s470 = scalar_select %p469, %s27, 1
          %s471 = scalar_lea.vmem %s9, %s470
        $region64: #{nemotron_forward.1} parent=39 // pred_fallthru
          _
        // Predicated region
        $region65: #{nemotron_forward.1} parent=39 // pred_check
          %p472 = pneg %p287
        $region66: #{nemotron_forward.1} parent=39 // pred_check_branch
          %474 = sbr.rel (%p472) target = $region68
        $region67: #{nemotron_forward.1} parent=39 // pred_region
          %s475 = sand.u32 %s27, 1
          %s476 = scalar_lea.sflag [#allocation7], %s475
          %s477 = sand.u32 %s277, 1
          %s478 = smul.addr %s477, 128
          %s479 = scalar_lea.vmem [#allocation6], %s478
          %s481 = ssub.s32 2048, 2048
          %482 = vsyncadd %s476, %s481
          %s483 = smul.addr %s27, 32
          %s484 = smul.addr %s483, 64
          %s485 = scalar_lea.hbm %s10, %s484
          %s486 = sshll.u32 %s479, 4
          %s487 = int_to_ptr.vmem [resolvable:$true] %s486
          %492 = dma.hbm_to_vmem [thread:$0]  %s485, 2048, %s487, %s476, 128, 128, 8
        $region68: #{nemotron_forward.1} parent=39 // pred_fallthru
          _
        // Predicated region
        $region69: #{nemotron_forward.1} parent=39 // pred_check
          %p493 = pneg %p313
        $region70: #{nemotron_forward.1} parent=39 // pred_check_branch
          %495 = sbr.rel (%p493) target = $region72
        $region71: #{nemotron_forward.1} parent=39 // pred_region
          %s496 = sand.u32 %s27, 1
          %s497 = scalar_lea.sflag [#allocation7], %s496
          %s498 = sand.u32 %s303, 1
          %s499 = smul.addr %s498, 128
          %s500 = scalar_lea.vmem [#allocation8], %s499
          %s502 = ssub.s32 2048, 2048
          %503 = vsyncadd %s497, %s502
          %s504 = smul.addr %s27, 32
          %s505 = smul.addr %s504, 64
          %s506 = scalar_lea.hbm %s11, %s505
          %s507 = sshll.u32 %s500, 4
          %s508 = int_to_ptr.vmem [resolvable:$true] %s507
          %513 = dma.hbm_to_vmem [thread:$0]  %s506, 2048, %s508, %s497, 64, 64, 4
        $region72: #{nemotron_forward.1} parent=39 // pred_fallthru
          _
      $region40: #{nemotron_forward.1} parent=5 // pred_fallthru
        _
      %p514 = scmp.le.s32.totalorder 1, %s27
      %p515 = scmp.lt.s32.totalorder %s27, 3
      %p516 = pnand %p514, %p515
      %p517 = pneg %p516
      // Predicated region
      $region73: #{nemotron_forward.1} parent=5 // pred_check
        _
      $region74: #{nemotron_forward.1} parent=5 // pred_check_branch
        %519 = sbr.rel (%p516) target = $region76
      $region75: #{nemotron_forward.1} parent=5 // pred_region
        %s520 = ssub.s32 %s27, 1
        %s521 = sand.u32 %s202, 1
        %s522 = scalar_lea.sflag [#allocation4], %s521
        %s523 = sand.u32 %s202, 1
        %s524 = smul.addr %s523, 64
        %s525 = scalar_lea.vmem [#allocation3], %s524
        // Predicated region
        $region77: #{nemotron_forward.1} parent=75 // pred_check
          %p526 = pneg %p215
        $region78: #{nemotron_forward.1} parent=75 // pred_check_branch
          %528 = sbr.rel (%p526) target = $region80
        $region79: #{nemotron_forward.1} parent=75 // pred_region
          %529 = dma.done %s522, 1024
        $region80: #{nemotron_forward.1} parent=75 // pred_fallthru
          _
        %s530 = sand.u32 %s32, 1
        %s531 = scalar_lea.sflag [#allocation7], %s530
        %s532 = sand.u32 %s280, 1
        %s533 = smul.addr %s532, 128
        %s534 = scalar_lea.vmem [#allocation6], %s533
        // Predicated region
        $region81: #{nemotron_forward.1} parent=75 // pred_check
          %p535 = pneg %p293
        $region82: #{nemotron_forward.1} parent=75 // pred_check_branch
          %537 = sbr.rel (%p535) target = $region84
        $region83: #{nemotron_forward.1} parent=75 // pred_region
          %538 = dma.done %s531, 2048
        $region84: #{nemotron_forward.1} parent=75 // pred_fallthru
          _
        %s539 = sand.u32 %s32, 1
        %s540 = scalar_lea.sflag [#allocation7], %s539
        %s541 = sand.u32 %s306, 1
        %s542 = smul.addr %s541, 128
        %s543 = scalar_lea.vmem [#allocation8], %s542
        // Predicated region
        $region85: #{nemotron_forward.1} parent=75 // pred_check
          %p544 = pneg %p319
        $region86: #{nemotron_forward.1} parent=75 // pred_check_branch
          %546 = sbr.rel (%p544) target = $region88
        $region87: #{nemotron_forward.1} parent=75 // pred_region
          %547 = dma.done %s540, 2048
        $region88: #{nemotron_forward.1} parent=75 // pred_fallthru
          _
        %p548 = pneg %p48
        %p549 = pneg %p45
        %p550 = pneg %p69
        %p551 = pneg %p66
        %p552 = pneg %p90
        %p553 = pneg %p87
        %p554 = pneg %p111
        %p555 = pneg %p108
        %p556 = scmp.lt.s32.totalorder %s32, 1
        %s557 = scalar_select %p556, %s32, 1
        %s558 = scalar_lea.vmem %s4, %s557
        %p559 = pneg %p137
        %p560 = pneg %p134
        %p561 = scmp.lt.s32.totalorder %s32, 1
        %s562 = scalar_select %p561, %s32, 1
        %s563 = scalar_lea.vmem %s5, %s562
        %p564 = pneg %p163
        %p565 = pneg %p160
        %p566 = scmp.lt.s32.totalorder %s32, 1
        %s567 = scalar_select %p566, %s32, 1
        %s568 = smul.addr %s567, 32
        %s569 = smul.addr %s568, 4
        %s570 = scalar_lea.vmem %s6, %s569
        %p571 = pneg %p189
        %p572 = pneg %p186
        %s573 = sand.u32 %s202, 1
        %s574 = scalar_lea.sflag [#allocation4], %s573
        %s575 = sand.u32 %s202, 1
        %s576 = smul.addr %s575, 64
        %s577 = scalar_lea.vmem [#allocation3], %s576
        %p578 = pneg %p215
        %p579 = pneg %p212
        %p580 = scmp.lt.s32.totalorder %s32, 1
        %s581 = scalar_select %p580, %s32, 1
        %s582 = scalar_lea.vmem %s8, %s581
        %p583 = pneg %p241
        %p584 = pneg %p238
        %p585 = scmp.lt.s32.totalorder %s32, 1
        %s586 = scalar_select %p585, %s32, 1
        %s587 = scalar_lea.vmem %s9, %s586
        %p588 = pneg %p267
        %p589 = pneg %p264
        %s590 = sand.u32 %s32, 1
        %s591 = scalar_lea.sflag [#allocation7], %s590
        %s592 = sand.u32 %s280, 1
        %s593 = smul.addr %s592, 128
        %s594 = scalar_lea.vmem [#allocation6], %s593
        %p595 = pneg %p293
        %p596 = pneg %p290
        %s597 = sand.u32 %s32, 1
        %s598 = scalar_lea.sflag [#allocation7], %s597
        %s599 = sand.u32 %s306, 1
        %s600 = smul.addr %s599, 128
        %s601 = scalar_lea.vmem [#allocation8], %s600
        %p602 = pneg %p319
        %p603 = pneg %p316
        %p604 = pneg %p340
        %p605 = pneg %p337
        %p606 = pneg %p361
        %p607 = pneg %p358
        %p608 = pneg %p382
        %p609 = pneg %p379
        %p610 = scmp.lt.s32.totalorder %s32, 1
        %s611 = scalar_select %p610, %s32, 1
        %s612 = scalar_lea.vmem %s4, %s611
        %p613 = scmp.lt.s32.totalorder %s32, 1
        %s614 = scalar_select %p613, %s32, 1
        %s615 = scalar_lea.vmem %s5, %s614
        %p616 = scmp.lt.s32.totalorder %s32, 1
        %s617 = scalar_select %p616, %s32, 1
        %s618 = smul.addr %s617, 32
        %s619 = smul.addr %s618, 4
        %s620 = scalar_lea.vmem %s6, %s619
        %p621 = scmp.lt.s32.totalorder %s32, 1
        %s622 = scalar_select %p621, %s32, 1
        %s623 = scalar_lea.vmem %s8, %s622
        %p624 = scmp.lt.s32.totalorder %s32, 1
        %s625 = scalar_select %p624, %s32, 1
        %s626 = scalar_lea.vmem %s9, %s625
        %p628 = scmp.eq.s32.totalorder %s32, 0
        // Predicated region
        $region89: #{nemotron_forward.1} parent=75 // pred_check
          %p629 = pneg %p628
        $region90: #{nemotron_forward.1} parent=75 // pred_check_branch
          %631 = sbr.rel (%p629) target = $region92
        $region91: #{nemotron_forward.1} parent=75 // pred_region
          %v632 = vld [vmem:[%s0] sm:$0xff]
          %633 = vst [vmem:[#allocation2] sm:$0xff] %v632
        $region92: #{nemotron_forward.1} parent=75 // pred_fallthru
          _
        %v634 = vld [vmem:[#allocation2] sm:$0xff]
        %v635 = vld [vmem:[%s612] sm:$0x1]
        %v636 = vld [vmem:[%s615] sm:$0x1]
        %637 = vadd.xlane.f32.xlu0 %v634
        %v638 = vpop.xlane.xlu0 %637
        %v639 = vrcp.pop 128.0
        %v640 = vmul.f32 %v638, %v639
        %v641 = vsub.f32 %v634, %v640
        %v642 = vmul.f32 %v641, %v641
        %643 = vadd.xlane.f32.xlu0 %v642
        %v644 = vpop.xlane.xlu0 %643
        %v645 = vmul.f32 %v644, %v639
        %v646 = vadd.f32 %v645, 1e-05
        %v647 = vrsqrt.pop %v646
        %v648 = vmul.f32 %v641, %v647
        %v649 = vadd.f32 %v635, 1.0
        %v651 = vlaneseq
        %v652 = vshrl.u32 %v651, 7
        %v653 = vsub.s32 0, %v652
        %v654 = vrot.slane %v649, %v653
        %v656 = vmul.f32 %v648, %v654
        %v658 = vlaneseq
        %v659 = vshrl.u32 %v658, 7
        %v660 = vsub.s32 0, %v659
        %v661 = vrot.slane %v636, %v660
        %v663 = vadd.f32 %v656, %v661
        %v664 = vpack.c.bf16 %v663, %v663
        %v665 = vld [vmem:[%s620] sm:$0xff]
        %v666 = vld [vmem:[%s620 + $0x8] sm:$0xff]
        %v667 = vld [vmem:[%s620 + $0x10] sm:$0xff]
        %v668 = vld [vmem:[%s620 + $0x18] sm:$0xff]
        %v669 = vld [vmem:[%s620 + $0x20] sm:$0xff]
        %v670 = vld [vmem:[%s620 + $0x28] sm:$0xff]
        %v671 = vld [vmem:[%s620 + $0x30] sm:$0xff]
        %v672 = vld [vmem:[%s620 + $0x38] sm:$0xff]
        %v673 = vld [vmem:[%s620 + $0x40] sm:$0xff]
        %v674 = vld [vmem:[%s620 + $0x48] sm:$0xff]
        %v675 = vld [vmem:[%s620 + $0x50] sm:$0xff]
        %v676 = vld [vmem:[%s620 + $0x58] sm:$0xff]
        %v677 = vld [vmem:[%s620 + $0x60] sm:$0xff]
        %v678 = vld [vmem:[%s620 + $0x68] sm:$0xff]
        %v679 = vld [vmem:[%s620 + $0x70] sm:$0xff]
        %v680 = vld [vmem:[%s620 + $0x78] sm:$0xff]
        %v697 = vunpack.c.l.b16 %v665
        %v698 = vunpack.c.h.b16 %v665
        %v699 = vunpack.c.l.b16 %v666
        %v700 = vunpack.c.h.b16 %v666
        %v701 = vunpack.c.l.b16 %v667
        %v702 = vunpack.c.h.b16 %v667
        %v703 = vunpack.c.l.b16 %v668
        %v704 = vunpack.c.h.b16 %v668
        %v705 = vunpack.c.l.b16 %v669
        %v706 = vunpack.c.h.b16 %v669
        %v707 = vunpack.c.l.b16 %v670
        %v708 = vunpack.c.h.b16 %v670
        %v709 = vunpack.c.l.b16 %v671
        %v710 = vunpack.c.h.b16 %v671
        %v711 = vunpack.c.l.b16 %v672
        %v712 = vunpack.c.h.b16 %v672
        %v713 = vunpack.c.l.b16 %v673
        %v714 = vunpack.c.h.b16 %v673
        %v715 = vunpack.c.l.b16 %v674
        %v716 = vunpack.c.h.b16 %v674
        %v717 = vunpack.c.l.b16 %v675
        %v718 = vunpack.c.h.b16 %v675
        %v719 = vunpack.c.l.b16 %v676
        %v720 = vunpack.c.h.b16 %v676
        %v721 = vunpack.c.l.b16 %v677
        %v722 = vunpack.c.h.b16 %v677
        %v723 = vunpack.c.l.b16 %v678
        %v724 = vunpack.c.h.b16 %v678
        %v725 = vunpack.c.l.b16 %v679
        %v726 = vunpack.c.h.b16 %v679
        %v727 = vunpack.c.l.b16 %v680
        %v728 = vunpack.c.h.b16 %v680
        %v729 = vpack.c.b16 %v699, %v697
        %v730 = vpack.c.b16 %v700, %v698
        %v731 = vpack.c.b16 %v703, %v701
        %v732 = vpack.c.b16 %v704, %v702
        %v733 = vpack.c.b16 %v707, %v705
        %v734 = vpack.c.b16 %v708, %v706
        %v735 = vpack.c.b16 %v711, %v709
        %v736 = vpack.c.b16 %v712, %v710
        %v737 = vpack.c.b16 %v715, %v713
        %v738 = vpack.c.b16 %v716, %v714
        %v739 = vpack.c.b16 %v719, %v717
        %v740 = vpack.c.b16 %v720, %v718
        %v741 = vpack.c.b16 %v723, %v721
        %v742 = vpack.c.b16 %v724, %v722
        %v743 = vpack.c.b16 %v727, %v725
        %v744 = vpack.c.b16 %v728, %v726
        %761 = vmatprep.subr.bf16.mxu0 %v730
        %762 = vmatpush1.bf16.msra.mxu0 %v729
        %763 = vmatprep.subr.bf16.mxu0 %v732
        %764 = vmatpush1.bf16.msra.mxu0 %v731
        %765 = vmatprep.subr.bf16.mxu0 %v734
        %766 = vmatpush1.bf16.msra.mxu0 %v733
        %767 = vmatprep.subr.bf16.mxu0 %v736
        %768 = vmatpush1.bf16.msra.mxu0 %v735
        %769 = vmatprep.subr.bf16.mxu0 %v738
        %770 = vmatpush1.bf16.msra.mxu0 %v737
        %771 = vmatprep.subr.bf16.mxu0 %v740
        %772 = vmatpush1.bf16.msra.mxu0 %v739
        %773 = vmatprep.subr.bf16.mxu0 %v742
        %774 = vmatpush1.bf16.msra.mxu0 %v741
        %775 = vmatprep.subr.bf16.mxu0 %v744
        %776 = vmatpush1.bf16.msra.mxu0 %v743
        %777 = vmatprep.subr.bf16.mxu0 0
        %778 = vmatpush1.bf16.msra.mxu0 0
        %779 = vmatprep.subr.bf16.mxu0 0
        %780 = vmatpush1.bf16.msra.mxu0 0
        %781 = vmatprep.subr.bf16.mxu0 0
        %782 = vmatpush1.bf16.msra.mxu0 0
        %783 = vmatprep.subr.bf16.mxu0 0
        %784 = vmatpush1.bf16.msra.mxu0 0
        %785 = vmatprep.subr.bf16.mxu0 0
        %786 = vmatpush1.bf16.msra.mxu0 0
        %787 = vmatprep.subr.bf16.mxu0 0
        %788 = vmatpush1.bf16.msra.mxu0 0
        %789 = vmatprep.subr.bf16.mxu0 0
        %790 = vmatpush1.bf16.msra.mxu0 0
        %791 = vmatprep.subr.bf16.mxu0 0
        %792 = vmatpush1.bf16.msra.mxu0 0
        %793 = vmatprep.mubr.bf16.mxu0 0
        %794 = vmatmul.mubr.bf16.gmra.mrb[0].mxu0 %v664
        %v795 = vpop.f32.mrb[0].mxu0
        %v796 = vadd.f32 0.0, %v795
        %v797 = vpop.f32.mrb[0].mxu0
        %v798 = vadd.f32 0.0, %v797
        %v799 = vpop.f32.mrb[0].mxu0
        %v800 = vpop.f32.mrb[0].mxu0
        %801 = vdwg.mxu0
        %v802 = vld [vmem:[%s1] sm:$0xff]
        %v803 = vld [vmem:[%s2] sm:$0xff]
        %v804 = vld [vmem:[%s3] sm:$0xf]
        %v805 = vld [vmem:[%s3 + $0x4] sm:$0xf]
        %v806 = vld [vmem:[%s3 + $0x8] sm:$0xf]
        %v807 = vld [vmem:[%s3 + $0xc] sm:$0xf]
        %v808 = vld [vmem:[%s3 + $0x10] sm:$0xf]
        %v809 = vld [vmem:[%s3 + $0x14] sm:$0xf]
        %v810 = vld [vmem:[%s3 + $0x18] sm:$0xf]
        %v811 = vld [vmem:[%s3 + $0x1c] sm:$0xf]
        %v812 = vld [vmem:[%s3 + $0x20] sm:$0xf]
        %v813 = vld [vmem:[%s3 + $0x24] sm:$0xf]
        %v814 = vld [vmem:[%s3 + $0x28] sm:$0xf]
        %v815 = vld [vmem:[%s3 + $0x2c] sm:$0xf]
        %v816 = vld [vmem:[%s3 + $0x30] sm:$0xf]
        %v817 = vld [vmem:[%s3 + $0x34] sm:$0xf]
        %v818 = vld [vmem:[%s3 + $0x38] sm:$0xf]
        %v819 = vld [vmem:[%s3 + $0x3c] sm:$0xf]
        %v820 = vmul.f32 %v796, %v802
        %v821 = vpack.c.bf16 %v796, %v796
        %v838 = vunpack.c.l.b16 %v804
        %v839 = vunpack.c.l.b16 %v805
        %v840 = vunpack.c.l.b16 %v806
        %v841 = vunpack.c.l.b16 %v807
        %v842 = vunpack.c.l.b16 %v808
        %v843 = vunpack.c.l.b16 %v809
        %v844 = vunpack.c.l.b16 %v810
        %v845 = vunpack.c.l.b16 %v811
        %v846 = vunpack.c.l.b16 %v812
        %v847 = vunpack.c.l.b16 %v813
        %v848 = vunpack.c.l.b16 %v814
        %v849 = vunpack.c.l.b16 %v815
        %v850 = vunpack.c.l.b16 %v816
        %v851 = vunpack.c.l.b16 %v817
        %v852 = vunpack.c.l.b16 %v818
        %v853 = vunpack.c.l.b16 %v819
        %v854 = vpack.c.b16 %v839, %v838
        %v855 = vpack.c.b16 %v841, %v840
        %v856 = vpack.c.b16 %v843, %v842
        %v857 = vpack.c.b16 %v845, %v844
        %v858 = vpack.c.b16 %v847, %v846
        %v859 = vpack.c.b16 %v849, %v848
        %v860 = vpack.c.b16 %v851, %v850
        %v861 = vpack.c.b16 %v853, %v852
        %870 = vmatprep.subr.bf16.mxu0 0
        %871 = vmatpush1.bf16.msra.mxu0 %v854
        %872 = vmatprep.subr.bf16.mxu0 0
        %873 = vmatpush1.bf16.msra.mxu0 %v855
        %874 = vmatprep.subr.bf16.mxu0 0
        %875 = vmatpush1.bf16.msra.mxu0 %v856
        %876 = vmatprep.subr.bf16.mxu0 0
        %877 = vmatpush1.bf16.msra.mxu0 %v857
        %878 = vmatprep.subr.bf16.mxu0 0
        %879 = vmatpush1.bf16.msra.mxu0 %v858
        %880 = vmatprep.subr.bf16.mxu0 0
        %881 = vmatpush1.bf16.msra.mxu0 %v859
        %882 = vmatprep.subr.bf16.mxu0 0
        %883 = vmatpush1.bf16.msra.mxu0 %v860
        %884 = vmatprep.subr.bf16.mxu0 0
        %885 = vmatpush1.bf16.msra.mxu0 %v861
        %886 = vmatprep.subr.bf16.mxu0 0
        %887 = vmatpush1.bf16.msra.mxu0 0
        %888 = vmatprep.subr.bf16.mxu0 0
        %889 = vmatpush1.bf16.msra.mxu0 0
        %890 = vmatprep.subr.bf16.mxu0 0
        %891 = vmatpush1.bf16.msra.mxu0 0
        %892 = vmatprep.subr.bf16.mxu0 0
        %893 = vmatpush1.bf16.msra.mxu0 0
        %894 = vmatprep.subr.bf16.mxu0 0
        %895 = vmatpush1.bf16.msra.mxu0 0
        %896 = vmatprep.subr.bf16.mxu0 0
        %897 = vmatpush1.bf16.msra.mxu0 0
        %898 = vmatprep.subr.bf16.mxu0 0
        %899 = vmatpush1.bf16.msra.mxu0 0
        %900 = vmatprep.subr.bf16.mxu0 0
        %901 = vmatpush1.bf16.msra.mxu0 0
        %902 = vmatprep.mubr.bf16.mxu0 0
        %903 = vmatmul.mubr.bf16.gmra.mrb[0].mxu0 %v821
        %v904 = vpop.f32.mrb[0].mxu0
        %v905 = vadd.f32 0.0, %v904
        %v906 = vpop.f32.mrb[0].mxu0
        %v907 = vpop.f32.mrb[0].mxu0
        %v908 = vpop.f32.mrb[0].mxu0
        %909 = vdwg.mxu0
        %v910 = vmul.f32 %v905, %v803
        %v911 = vadd.f32 %v820, %v910
        %v912 = vmul.f32 %v798, %v802
        %v913 = vpack.c.bf16 %v798, %v798
        %vm914 = vcmask 523264
        %v916 = vsel %vm914, %v913, 0
        %918 = vmatprep.subr.bf16.mxu0 0
        %919 = vmatpush1.bf16.msra.mxu0 %v854
        %920 = vmatprep.subr.bf16.mxu0 0
        %921 = vmatpush1.bf16.msra.mxu0 %v855
        %922 = vmatprep.subr.bf16.mxu0 0
        %923 = vmatpush1.bf16.msra.mxu0 %v856
        %924 = vmatprep.subr.bf16.mxu0 0
        %925 = vmatpush1.bf16.msra.mxu0 %v857
        %926 = vmatprep.subr.bf16.mxu0 0
        %927 = vmatpush1.bf16.msra.mxu0 0
        %928 = vmatprep.subr.bf16.mxu0 0
        %929 = vmatpush1.bf16.msra.mxu0 0
        %930 = vmatprep.subr.bf16.mxu0 0
        %931 = vmatpush1.bf16.msra.mxu0 0
        %932 = vmatprep.subr.bf16.mxu0 0
        %933 = vmatpush1.bf16.msra.mxu0 0
        %934 = vmatprep.subr.bf16.mxu0 0
        %935 = vmatpush1.bf16.msra.mxu0 0
        %936 = vmatprep.subr.bf16.mxu0 0
        %937 = vmatpush1.bf16.msra.mxu0 0
        %938 = vmatprep.subr.bf16.mxu0 0
        %939 = vmatpush1.bf16.msra.mxu0 0
        %940 = vmatprep.subr.bf16.mxu0 0
        %941 = vmatpush1.bf16.msra.mxu0 0
        %942 = vmatprep.subr.bf16.mxu0 0
        %943 = vmatpush1.bf16.msra.mxu0 0
        %944 = vmatprep.subr.bf16.mxu0 0
        %945 = vmatpush1.bf16.msra.mxu0 0
        %946 = vmatprep.subr.bf16.mxu0 0
        %947 = vmatpush1.bf16.msra.mxu0 0
        %948 = vmatprep.subr.bf16.mxu0 0
        %949 = vmatpush1.bf16.msra.mxu0 0
        %950 = vmatprep.mubr.bf16.mxu0 0
        %951 = vmatmul.mubr.bf16.gmra.mrb[0].mxu0 %v916
        %v952 = vpop.f32.mrb[0].mxu0
        %v953 = vadd.f32 0.0, %v952
        %v954 = vpop.f32.mrb[0].mxu0
        %v955 = vpop.f32.mrb[0].mxu0
        %v956 = vpop.f32.mrb[0].mxu0
        %957 = vdwg.mxu0
        %v958 = vmul.f32 %v953, %v803
        %v959 = vadd.f32 %v912, %v958
        %v960 = vlaneseq
        %v961 = vshrl.u32 %v960, 7
        %v962 = vlaneseq
        %v963 = vand.u32 %v962, 127
        %vm964 = vcmp.le.s32.totalorder %v963, %v961
        %v965 = vpack.c.bf16 %v911, %v911
        %v966 = vpack.c.bf16 %v959, %v959
        %vm967 = vcmask 261120
        %v969 = vsel %vm967, %v965, 0
        %v972 = vsel %vm967, %v966, 0
        %974 = vmatprep.subr.bf16.mxu0 0
        %975 = vmatpush1.bf16.xpose.msra.mxu0 %v972
        %976 = vmatprep.subr.bf16.mxu0 0
        %977 = vmatpush1.bf16.xpose.msra.mxu0 0
        %978 = vmatprep.subr.bf16.mxu0 0
        %979 = vmatpush1.bf16.xpose.msra.mxu0 0
        %980 = vmatprep.subr.bf16.mxu0 0
        %981 = vmatpush1.bf16.xpose.msra.mxu0 0
        %982 = vmatprep.subr.bf16.mxu0 0
        %983 = vmatpush1.bf16.xpose.msra.mxu0 0
        %984 = vmatprep.subr.bf16.mxu0 0
        %985 = vmatpush1.bf16.xpose.msra.mxu0 0
        %986 = vmatprep.subr.bf16.mxu0 0
        %987 = vmatpush1.bf16.xpose.msra.mxu0 0
        %988 = vmatprep.subr.bf16.mxu0 0
        %989 = vmatpush1.bf16.xpose.msra.mxu0 0
        %990 = vmatprep.subr.bf16.mxu0 0
        %991 = vmatpush1.bf16.xpose.msra.mxu0 0
        %992 = vmatprep.subr.bf16.mxu0 0
        %993 = vmatpush1.bf16.xpose.msra.mxu0 0
        %994 = vmatprep.subr.bf16.mxu0 0
        %995 = vmatpush1.bf16.xpose.msra.mxu0 0
        %996 = vmatprep.subr.bf16.mxu0 0
        %997 = vmatpush1.bf16.xpose.msra.mxu0 0
        %998 = vmatprep.subr.bf16.mxu0 0
        %999 = vmatpush1.bf16.xpose.msra.mxu0 0
        %1000 = vmatprep.subr.bf16.mxu0 0
        %1001 = vmatpush1.bf16.xpose.msra.mxu0 0
        %1002 = vmatprep.subr.bf16.mxu0 0
        %1003 = vmatpush1.bf16.xpose.msra.mxu0 0
        %1004 = vmatprep.subr.bf16.mxu0 0
        %1005 = vmatpush1.bf16.xpose.msra.mxu0 0
        %1006 = vmatprep.mubr.bf16.mxu0 0
        %1007 = vmatmul.mubr.bf16.gmra.mrb[0].mxu0 %v969
        %v1008 = vpop.f32.mrb[0].mxu0
        %v1009 = vadd.f32 0.0, %v1008
        %v1010 = vpop.f32.mrb[0].mxu0
        %v1011 = vpop.f32.mrb[0].mxu0
        %v1012 = vpop.f32.mrb[0].mxu0
        %1013 = vdwg.mxu0
        %v1014 = vsel %vm964, %v1009, -1e+30
        %vm1015 = vcmask 64512
        %v1016 = vsel %vm1015, %v1014, -inf
        %1017 = vmax.xlane.f32.xlu0 %v1016
        %v1018 = vpop.xlane.xlu0 %1017
        %v1019 = vsub.f32 %v1014, %v1018
        %v1020 = vmul.f32 %v1019, 1.442695
        %v1021 = vpow.pop %v1020
        %v1022 = vsel %vm1015, %v1021, 0.0
        %1023 = vadd.xlane.f32.xlu0 %v1022
        %v1024 = vpop.xlane.xlu0 %1023
        %v1025 = vrcp.pop %v1024
        %v1026 = vmul.f32 %v1021, %v1025
        %v1027 = vpack.c.bf16 %v1026, %v1026
        %1029 = vrot.lane.b32.xlu0 %v913, 64
        %v1030 = vpop.permute.xlu0 %1029
        %v1032 = vsel %vm1015, %v1027, 0
        %vm1034 = vcmask 1043456
        %v1036 = vsel %vm1034, %v1030, 0
        %1038 = vmatprep.subr.bf16.mxu0 0
        %1039 = vmatpush1.bf16.msra.mxu0 %v1036
        %1040 = vmatprep.subr.bf16.mxu0 0
        %1041 = vmatpush1.bf16.msra.mxu0 0
        %1042 = vmatprep.subr.bf16.mxu0 0
        %1043 = vmatpush1.bf16.msra.mxu0 0
        %1044 = vmatprep.subr.bf16.mxu0 0
        %1045 = vmatpush1.bf16.msra.mxu0 0
        %1046 = vmatprep.subr.bf16.mxu0 0
        %1047 = vmatpush1.bf16.msra.mxu0 0
        %1048 = vmatprep.subr.bf16.mxu0 0
        %1049 = vmatpush1.bf16.msra.mxu0 0
        %1050 = vmatprep.subr.bf16.mxu0 0
        %1051 = vmatpush1.bf16.msra.mxu0 0
        %1052 = vmatprep.subr.bf16.mxu0 0
        %1053 = vmatpush1.bf16.msra.mxu0 0
        %1054 = vmatprep.subr.bf16.mxu0 0
        %1055 = vmatpush1.bf16.msra.mxu0 0
        %1056 = vmatprep.subr.bf16.mxu0 0
        %1057 = vmatpush1.bf16.msra.mxu0 0
        %1058 = vmatprep.subr.bf16.mxu0 0
        %1059 = vmatpush1.bf16.msra.mxu0 0
        %1060 = vmatprep.subr.bf16.mxu0 0
        %1061 = vmatpush1.bf16.msra.mxu0 0
        %1062 = vmatprep.subr.bf16.mxu0 0
        %1063 = vmatpush1.bf16.msra.mxu0 0
        %1064 = vmatprep.subr.bf16.mxu0 0
        %1065 = vmatpush1.bf16.msra.mxu0 0
        %1066 = vmatprep.subr.bf16.mxu0 0
        %1067 = vmatpush1.bf16.msra.mxu0 0
        %1068 = vmatprep.subr.bf16.mxu0 0
        %1069 = vmatpush1.bf16.msra.mxu0 0
        %1070 = vmatprep.mubr.bf16.mxu0 0
        %1071 = vmatmul.mubr.bf16.gmra.mrb[0].mxu0 %v1032
        %v1072 = vpop.f32.mrb[0].mxu0
        %v1073 = vadd.f32 0.0, %v1072
        %v1074 = vpop.f32.mrb[0].mxu0
        %v1075 = vpop.f32.mrb[0].mxu0
        %v1076 = vpop.f32.mrb[0].mxu0
        %1077 = vdwg.mxu0
        %1079 = vrot.lane.b32.xlu0 %v965, 96
        %v1080 = vpop.permute.xlu0 %1079
        %v1082 = vsel %vm967, %v1080, 0
        %1084 = vmatprep.subr.bf16.mxu0 0
        %1085 = vmatpush1.bf16.xpose.msra.mxu0 %v972
        %1086 = vmatprep.subr.bf16.mxu0 0
        %1087 = vmatpush1.bf16.xpose.msra.mxu0 0
        %1088 = vmatprep.subr.bf16.mxu0 0
        %1089 = vmatpush1.bf16.xpose.msra.mxu0 0
        %1090 = vmatprep.subr.bf16.mxu0 0
        %1091 = vmatpush1.bf16.xpose.msra.mxu0 0
        %1092 = vmatprep.subr.bf16.mxu0 0
        %1093 = vmatpush1.bf16.xpose.msra.mxu0 0
        %1094 = vmatprep.subr.bf16.mxu0 0
        %1095 = vmatpush1.bf16.xpose.msra.mxu0 0
        %1096 = vmatprep.subr.bf16.mxu0 0
        %1097 = vmatpush1.bf16.xpose.msra.mxu0 0
        %1098 = vmatprep.subr.bf16.mxu0 0
        %1099 = vmatpush1.bf16.xpose.msra.mxu0 0
        %1100 = vmatprep.subr.bf16.mxu0 0
        %1101 = vmatpush1.bf16.xpose.msra.mxu0 0
        %1102 = vmatprep.subr.bf16.mxu0 0
        %1103 = vmatpush1.bf16.xpose.msra.mxu0 0
        %1104 = vmatprep.subr.bf16.mxu0 0
        %1105 = vmatpush1.bf16.xpose.msra.mxu0 0
        %1106 = vmatprep.subr.bf16.mxu0 0
        %1107 = vmatpush1.bf16.xpose.msra.mxu0 0
        %1108 = vmatprep.subr.bf16.mxu0 0
        %1109 = vmatpush1.bf16.xpose.msra.mxu0 0
        %1110 = vmatprep.subr.bf16.mxu0 0
        %1111 = vmatpush1.bf16.xpose.msra.mxu0 0
        %1112 = vmatprep.subr.bf16.mxu0 0
        %1113 = vmatpush1.bf16.xpose.msra.mxu0 0
        %1114 = vmatprep.subr.bf16.mxu0 0
        %1115 = vmatpush1.bf16.xpose.msra.mxu0 0
        %1116 = vmatprep.mubr.bf16.mxu0 0
        %1117 = vmatmul.mubr.bf16.gmra.mrb[0].mxu0 %v1082
        %v1118 = vpop.f32.mrb[0].mxu0
        %v1119 = vadd.f32 0.0, %v1118
        %v1120 = vpop.f32.mrb[0].mxu0
        %v1121 = vpop.f32.mrb[0].mxu0
        %v1122 = vpop.f32.mrb[0].mxu0
        %1123 = vdwg.mxu0
        %v1124 = vsel %vm964, %v1119, -1e+30
        %v1125 = vsel %vm1015, %v1124, -inf
        %1126 = vmax.xlane.f32.xlu0 %v1125
        %v1127 = vpop.xlane.xlu0 %1126
        %v1128 = vsub.f32 %v1124, %v1127
        %v1129 = vmul.f32 %v1128, 1.442695
        %v1130 = vpow.pop %v1129
        %v1131 = vsel %vm1015, %v1130, 0.0
        %1132 = vadd.xlane.f32.xlu0 %v1131
        %v1133 = vpop.xlane.xlu0 %1132
        %v1134 = vrcp.pop %v1133
        %v1135 = vmul.f32 %v1130, %v1134
        %v1136 = vpack.c.bf16 %v1135, %v1135
        %v1138 = vsel %vm1015, %v1136, 0
        %1140 = vmatprep.subr.bf16.mxu0 0
        %1141 = vmatpush1.bf16.msra.mxu0 %v1036
        %1142 = vmatprep.subr.bf16.mxu0 0
        %1143 = vmatpush1.bf16.msra.mxu0 0
        %1144 = vmatprep.subr.bf16.mxu0 0
        %1145 = vmatpush1.bf16.msra.mxu0 0
        %1146 = vmatprep.subr.bf16.mxu0 0
        %1147 = vmatpush1.bf16.msra.mxu0 0
        %1148 = vmatprep.subr.bf16.mxu0 0
        %1149 = vmatpush1.bf16.msra.mxu0 0
        %1150 = vmatprep.subr.bf16.mxu0 0
        %1151 = vmatpush1.bf16.msra.mxu0 0
        %1152 = vmatprep.subr.bf16.mxu0 0
        %1153 = vmatpush1.bf16.msra.mxu0 0
        %1154 = vmatprep.subr.bf16.mxu0 0
        %1155 = vmatpush1.bf16.msra.mxu0 0
        %1156 = vmatprep.subr.bf16.mxu0 0
        %1157 = vmatpush1.bf16.msra.mxu0 0
        %1158 = vmatprep.subr.bf16.mxu0 0
        %1159 = vmatpush1.bf16.msra.mxu0 0
        %1160 = vmatprep.subr.bf16.mxu0 0
        %1161 = vmatpush1.bf16.msra.mxu0 0
        %1162 = vmatprep.subr.bf16.mxu0 0
        %1163 = vmatpush1.bf16.msra.mxu0 0
        %1164 = vmatprep.subr.bf16.mxu0 0
        %1165 = vmatpush1.bf16.msra.mxu0 0
        %1166 = vmatprep.subr.bf16.mxu0 0
        %1167 = vmatpush1.bf16.msra.mxu0 0
        %1168 = vmatprep.subr.bf16.mxu0 0
        %1169 = vmatpush1.bf16.msra.mxu0 0
        %1170 = vmatprep.subr.bf16.mxu0 0
        %1171 = vmatpush1.bf16.msra.mxu0 0
        %1172 = vmatprep.mubr.bf16.mxu0 0
        %1173 = vmatmul.mubr.bf16.gmra.mrb[0].mxu0 %v1138
        %v1174 = vpop.f32.mrb[0].mxu0
        %v1175 = vadd.f32 0.0, %v1174
        %v1176 = vpop.f32.mrb[0].mxu0
        %v1177 = vpop.f32.mrb[0].mxu0
        %v1178 = vpop.f32.mrb[0].mxu0
        %1179 = vdwg.mxu0
        %1180 = vrot.lane.b32.xlu0 %v965, 64
        %v1181 = vpop.permute.xlu0 %1180
        %1183 = vrot.lane.b32.xlu0 %v966, 96
        %v1184 = vpop.permute.xlu0 %1183
        %v1186 = vsel %vm967, %v1181, 0
        %v1189 = vsel %vm967, %v1184, 0
        %1191 = vmatprep.subr.bf16.mxu0 0
        %1192 = vmatpush1.bf16.xpose.msra.mxu0 %v1189
        %1193 = vmatprep.subr.bf16.mxu0 0
        %1194 = vmatpush1.bf16.xpose.msra.mxu0 0
        %1195 = vmatprep.subr.bf16.mxu0 0
        %1196 = vmatpush1.bf16.xpose.msra.mxu0 0
        %1197 = vmatprep.subr.bf16.mxu0 0
        %1198 = vmatpush1.bf16.xpose.msra.mxu0 0
        %1199 = vmatprep.subr.bf16.mxu0 0
        %1200 = vmatpush1.bf16.xpose.msra.mxu0 0
        %1201 = vmatprep.subr.bf16.mxu0 0
        %1202 = vmatpush1.bf16.xpose.msra.mxu0 0
        %1203 = vmatprep.subr.bf16.mxu0 0
        %1204 = vmatpush1.bf16.xpose.msra.mxu0 0
        %1205 = vmatprep.subr.bf16.mxu0 0
        %1206 = vmatpush1.bf16.xpose.msra.mxu0 0
        %1207 = vmatprep.subr.bf16.mxu0 0
        %1208 = vmatpush1.bf16.xpose.msra.mxu0 0
        %1209 = vmatprep.subr.bf16.mxu0 0
        %1210 = vmatpush1.bf16.xpose.msra.mxu0 0
        %1211 = vmatprep.subr.bf16.mxu0 0
        %1212 = vmatpush1.bf16.xpose.msra.mxu0 0
        %1213 = vmatprep.subr.bf16.mxu0 0
        %1214 = vmatpush1.bf16.xpose.msra.mxu0 0
        %1215 = vmatprep.subr.bf16.mxu0 0
        %1216 = vmatpush1.bf16.xpose.msra.mxu0 0
        %1217 = vmatprep.subr.bf16.mxu0 0
        %1218 = vmatpush1.bf16.xpose.msra.mxu0 0
        %1219 = vmatprep.subr.bf16.mxu0 0
        %1220 = vmatpush1.bf16.xpose.msra.mxu0 0
        %1221 = vmatprep.subr.bf16.mxu0 0
        %1222 = vmatpush1.bf16.xpose.msra.mxu0 0
        %1223 = vmatprep.mubr.bf16.mxu0 0
        %1224 = vmatmul.mubr.bf16.gmra.mrb[0].mxu0 %v1186
        %v1225 = vpop.f32.mrb[0].mxu0
        %v1226 = vadd.f32 0.0, %v1225
        %v1227 = vpop.f32.mrb[0].mxu0
        %v1228 = vpop.f32.mrb[0].mxu0
        %v1229 = vpop.f32.mrb[0].mxu0
        %1230 = vdwg.mxu0
        %v1231 = vsel %vm964, %v1226, -1e+30
        %v1232 = vsel %vm1015, %v1231, -inf
        %1233 = vmax.xlane.f32.xlu0 %v1232
        %v1234 = vpop.xlane.xlu0 %1233
        %v1235 = vsub.f32 %v1231, %v1234
        %v1236 = vmul.f32 %v1235, 1.442695
        %v1237 = vpow.pop %v1236
        %v1238 = vsel %vm1015, %v1237, 0.0
        %1239 = vadd.xlane.f32.xlu0 %v1238
        %v1240 = vpop.xlane.xlu0 %1239
        %v1241 = vrcp.pop %v1240
        %v1242 = vmul.f32 %v1237, %v1241
        %v1243 = vpack.c.bf16 %v1242, %v1242
        %1244 = vrot.lane.b32.xlu0 %v913, 32
        %v1245 = vpop.permute.xlu0 %1244
        %v1247 = vsel %vm1015, %v1243, 0
        %v1250 = vsel %vm1034, %v1245, 0
        %1252 = vmatprep.subr.bf16.mxu0 0
        %1253 = vmatpush1.bf16.msra.mxu0 %v1250
        %1254 = vmatprep.subr.bf16.mxu0 0
        %1255 = vmatpush1.bf16.msra.mxu0 0
        %1256 = vmatprep.subr.bf16.mxu0 0
        %1257 = vmatpush1.bf16.msra.mxu0 0
        %1258 = vmatprep.subr.bf16.mxu0 0
        %1259 = vmatpush1.bf16.msra.mxu0 0
        %1260 = vmatprep.subr.bf16.mxu0 0
        %1261 = vmatpush1.bf16.msra.mxu0 0
        %1262 = vmatprep.subr.bf16.mxu0 0
        %1263 = vmatpush1.bf16.msra.mxu0 0
        %1264 = vmatprep.subr.bf16.mxu0 0
        %1265 = vmatpush1.bf16.msra.mxu0 0
        %1266 = vmatprep.subr.bf16.mxu0 0
        %1267 = vmatpush1.bf16.msra.mxu0 0
        %1268 = vmatprep.subr.bf16.mxu0 0
        %1269 = vmatpush1.bf16.msra.mxu0 0
        %1270 = vmatprep.subr.bf16.mxu0 0
        %1271 = vmatpush1.bf16.msra.mxu0 0
        %1272 = vmatprep.subr.bf16.mxu0 0
        %1273 = vmatpush1.bf16.msra.mxu0 0
        %1274 = vmatprep.subr.bf16.mxu0 0
        %1275 = vmatpush1.bf16.msra.mxu0 0
        %1276 = vmatprep.subr.bf16.mxu0 0
        %1277 = vmatpush1.bf16.msra.mxu0 0
        %1278 = vmatprep.subr.bf16.mxu0 0
        %1279 = vmatpush1.bf16.msra.mxu0 0
        %1280 = vmatprep.subr.bf16.mxu0 0
        %1281 = vmatpush1.bf16.msra.mxu0 0
        %1282 = vmatprep.subr.bf16.mxu0 0
        %1283 = vmatpush1.bf16.msra.mxu0 0
        %1284 = vmatprep.mubr.bf16.mxu0 0
        %1285 = vmatmul.mubr.bf16.gmra.mrb[0].mxu0 %v1247
        %v1286 = vpop.f32.mrb[0].mxu0
        %v1287 = vadd.f32 0.0, %v1286
        %v1288 = vpop.f32.mrb[0].mxu0
        %v1289 = vpop.f32.mrb[0].mxu0
        %v1290 = vpop.f32.mrb[0].mxu0
        %1291 = vdwg.mxu0
        %1292 = vrot.lane.b32.xlu0 %v965, 32
        %v1293 = vpop.permute.xlu0 %1292
        %v1295 = vsel %vm967, %v1293, 0
        %1297 = vmatprep.subr.bf16.mxu0 0
        %1298 = vmatpush1.bf16.xpose.msra.mxu0 %v1189
        %1299 = vmatprep.subr.bf16.mxu0 0
        %1300 = vmatpush1.bf16.xpose.msra.mxu0 0
        %1301 = vmatprep.subr.bf16.mxu0 0
        %1302 = vmatpush1.bf16.xpose.msra.mxu0 0
        %1303 = vmatprep.subr.bf16.mxu0 0
        %1304 = vmatpush1.bf16.xpose.msra.mxu0 0
        %1305 = vmatprep.subr.bf16.mxu0 0
        %1306 = vmatpush1.bf16.xpose.msra.mxu0 0
        %1307 = vmatprep.subr.bf16.mxu0 0
        %1308 = vmatpush1.bf16.xpose.msra.mxu0 0
        %1309 = vmatprep.subr.bf16.mxu0 0
        %1310 = vmatpush1.bf16.xpose.msra.mxu0 0
        %1311 = vmatprep.subr.bf16.mxu0 0
        %1312 = vmatpush1.bf16.xpose.msra.mxu0 0
        %1313 = vmatprep.subr.bf16.mxu0 0
        %1314 = vmatpush1.bf16.xpose.msra.mxu0 0
        %1315 = vmatprep.subr.bf16.mxu0 0
        %1316 = vmatpush1.bf16.xpose.msra.mxu0 0
        %1317 = vmatprep.subr.bf16.mxu0 0
        %1318 = vmatpush1.bf16.xpose.msra.mxu0 0
        %1319 = vmatprep.subr.bf16.mxu0 0
        %1320 = vmatpush1.bf16.xpose.msra.mxu0 0
        %1321 = vmatprep.subr.bf16.mxu0 0
        %1322 = vmatpush1.bf16.xpose.msra.mxu0 0
        %1323 = vmatprep.subr.bf16.mxu0 0
        %1324 = vmatpush1.bf16.xpose.msra.mxu0 0
        %1325 = vmatprep.subr.bf16.mxu0 0
        %1326 = vmatpush1.bf16.xpose.msra.mxu0 0
        %1327 = vmatprep.subr.bf16.mxu0 0
        %1328 = vmatpush1.bf16.xpose.msra.mxu0 0
        %1329 = vmatprep.mubr.bf16.mxu0 0
        %1330 = vmatmul.mubr.bf16.gmra.mrb[0].mxu0 %v1295
        %v1331 = vpop.f32.mrb[0].mxu0
        %v1332 = vadd.f32 0.0, %v1331
        %v1333 = vpop.f32.mrb[0].mxu0
        %v1334 = vpop.f32.mrb[0].mxu0
        %v1335 = vpop.f32.mrb[0].mxu0
        %1336 = vdwg.mxu0
        %v1337 = vsel %vm964, %v1332, -1e+30
        %v1338 = vsel %vm1015, %v1337, -inf
        %1339 = vmax.xlane.f32.xlu0 %v1338
        %v1340 = vpop.xlane.xlu0 %1339
        %v1341 = vsub.f32 %v1337, %v1340
        %v1342 = vmul.f32 %v1341, 1.442695
        %v1343 = vpow.pop %v1342
        %v1344 = vsel %vm1015, %v1343, 0.0
        %1345 = vadd.xlane.f32.xlu0 %v1344
        %v1346 = vpop.xlane.xlu0 %1345
        %v1347 = vrcp.pop %v1346
        %v1348 = vmul.f32 %v1343, %v1347
        %v1349 = vpack.c.bf16 %v1348, %v1348
        %v1351 = vsel %vm1015, %v1349, 0
        %1353 = vmatprep.subr.bf16.mxu0 0
        %1354 = vmatpush1.bf16.msra.mxu0 %v1250
        %1355 = vmatprep.subr.bf16.mxu0 0
        %1356 = vmatpush1.bf16.msra.mxu0 0
        %1357 = vmatprep.subr.bf16.mxu0 0
        %1358 = vmatpush1.bf16.msra.mxu0 0
        %1359 = vmatprep.subr.bf16.mxu0 0
        %1360 = vmatpush1.bf16.msra.mxu0 0
        %1361 = vmatprep.subr.bf16.mxu0 0
        %1362 = vmatpush1.bf16.msra.mxu0 0
        %1363 = vmatprep.subr.bf16.mxu0 0
        %1364 = vmatpush1.bf16.msra.mxu0 0
        %1365 = vmatprep.subr.bf16.mxu0 0
        %1366 = vmatpush1.bf16.msra.mxu0 0
        %1367 = vmatprep.subr.bf16.mxu0 0
        %1368 = vmatpush1.bf16.msra.mxu0 0
        %1369 = vmatprep.subr.bf16.mxu0 0
        %1370 = vmatpush1.bf16.msra.mxu0 0
        %1371 = vmatprep.subr.bf16.mxu0 0
        %1372 = vmatpush1.bf16.msra.mxu0 0
        %1373 = vmatprep.subr.bf16.mxu0 0
        %1374 = vmatpush1.bf16.msra.mxu0 0
        %1375 = vmatprep.subr.bf16.mxu0 0
        %1376 = vmatpush1.bf16.msra.mxu0 0
        %1377 = vmatprep.subr.bf16.mxu0 0
        %1378 = vmatpush1.bf16.msra.mxu0 0
        %1379 = vmatprep.subr.bf16.mxu0 0
        %1380 = vmatpush1.bf16.msra.mxu0 0
        %1381 = vmatprep.subr.bf16.mxu0 0
        %1382 = vmatpush1.bf16.msra.mxu0 0
        %1383 = vmatprep.subr.bf16.mxu0 0
        %1384 = vmatpush1.bf16.msra.mxu0 0
        %1385 = vmatprep.mubr.bf16.mxu0 0
        %1386 = vmatmul.mubr.bf16.gmra.mrb[0].mxu0 %v1351
        %v1387 = vpop.f32.mrb[0].mxu0
        %v1388 = vadd.f32 0.0, %v1387
        %v1389 = vpop.f32.mrb[0].mxu0
        %v1390 = vpop.f32.mrb[0].mxu0
        %v1391 = vpop.f32.mrb[0].mxu0
        %1392 = vdwg.mxu0
        %1394 = vrot.lane.b32.xlu0 %v1175, 32
        %v1395 = vpop.permute.xlu0 %1394
        %1398 = vrot.lane.b32.xlu0 %v1287, 64
        %v1399 = vpop.permute.xlu0 %1398
        %1402 = vrot.lane.b32.xlu0 %v1388, 96
        %v1403 = vpop.permute.xlu0 %1402
        %v1405 = vsel %vm967, %v1073, %v1395
        %v1406 = vsel %vm914, %v1405, %v1399
        %vm1407 = vcmask 785408
        %v1408 = vsel %vm1407, %v1406, %v1403
        %v1409 = vpack.c.bf16 %v1408, %v1408
        %v1410 = vld [vmem:[%s525] sm:$0xf]
        %v1411 = vld [vmem:[%s525 + $0x4] sm:$0xf]
        %v1412 = vld [vmem:[%s525 + $0x8] sm:$0xf]
        %v1413 = vld [vmem:[%s525 + $0xc] sm:$0xf]
        %v1414 = vld [vmem:[%s525 + $0x10] sm:$0xf]
        %v1415 = vld [vmem:[%s525 + $0x14] sm:$0xf]
        %v1416 = vld [vmem:[%s525 + $0x18] sm:$0xf]
        %v1417 = vld [vmem:[%s525 + $0x1c] sm:$0xf]
        %v1418 = vld [vmem:[%s525 + $0x20] sm:$0xf]
        %v1419 = vld [vmem:[%s525 + $0x24] sm:$0xf]
        %v1420 = vld [vmem:[%s525 + $0x28] sm:$0xf]
        %v1421 = vld [vmem:[%s525 + $0x2c] sm:$0xf]
        %v1422 = vld [vmem:[%s525 + $0x30] sm:$0xf]
        %v1423 = vld [vmem:[%s525 + $0x34] sm:$0xf]
        %v1424 = vld [vmem:[%s525 + $0x38] sm:$0xf]
        %v1425 = vld [vmem:[%s525 + $0x3c] sm:$0xf]
        %v1442 = vunpack.c.l.b16 %v1410
        %v1443 = vunpack.c.l.b16 %v1411
        %v1444 = vunpack.c.l.b16 %v1412
        %v1445 = vunpack.c.l.b16 %v1413
        %v1446 = vunpack.c.l.b16 %v1414
        %v1447 = vunpack.c.l.b16 %v1415
        %v1448 = vunpack.c.l.b16 %v1416
        %v1449 = vunpack.c.l.b16 %v1417
        %v1450 = vunpack.c.l.b16 %v1418
        %v1451 = vunpack.c.l.b16 %v1419
        %v1452 = vunpack.c.l.b16 %v1420
        %v1453 = vunpack.c.l.b16 %v1421
        %v1454 = vunpack.c.l.b16 %v1422
        %v1455 = vunpack.c.l.b16 %v1423
        %v1456 = vunpack.c.l.b16 %v1424
        %v1457 = vunpack.c.l.b16 %v1425
        %v1458 = vpack.c.b16 %v1443, %v1442
        %v1459 = vpack.c.b16 %v1445, %v1444
        %v1460 = vpack.c.b16 %v1447, %v1446
        %v1461 = vpack.c.b16 %v1449, %v1448
        %v1462 = vpack.c.b16 %v1451, %v1450
        %v1463 = vpack.c.b16 %v1453, %v1452
        %v1464 = vpack.c.b16 %v1455, %v1454
        %v1465 = vpack.c.b16 %v1457, %v1456
        %1474 = vmatprep.subr.bf16.mxu0 0
        %1475 = vmatpush1.bf16.msra.mxu0 %v1458
        %1476 = vmatprep.subr.bf16.mxu0 0
        %1477 = vmatpush1.bf16.msra.mxu0 %v1459
        %1478 = vmatprep.subr.bf16.mxu0 0
        %1479 = vmatpush1.bf16.msra.mxu0 %v1460
        %1480 = vmatprep.subr.bf16.mxu0 0
        %1481 = vmatpush1.bf16.msra.mxu0 %v1461
        %1482 = vmatprep.subr.bf16.mxu0 0
        %1483 = vmatpush1.bf16.msra.mxu0 %v1462
        %1484 = vmatprep.subr.bf16.mxu0 0
        %1485 = vmatpush1.bf16.msra.mxu0 %v1463
        %1486 = vmatprep.subr.bf16.mxu0 0
        %1487 = vmatpush1.bf16.msra.mxu0 %v1464
        %1488 = vmatprep.subr.bf16.mxu0 0
        %1489 = vmatpush1.bf16.msra.mxu0 %v1465
        %1490 = vmatprep.subr.bf16.mxu0 0
        %1491 = vmatpush1.bf16.msra.mxu0 0
        %1492 = vmatprep.subr.bf16.mxu0 0
        %1493 = vmatpush1.bf16.msra.mxu0 0
        %1494 = vmatprep.subr.bf16.mxu0 0
        %1495 = vmatpush1.bf16.msra.mxu0 0
        %1496 = vmatprep.subr.bf16.mxu0 0
        %1497 = vmatpush1.bf16.msra.mxu0 0
        %1498 = vmatprep.subr.bf16.mxu0 0
        %1499 = vmatpush1.bf16.msra.mxu0 0
        %1500 = vmatprep.subr.bf16.mxu0 0
        %1501 = vmatpush1.bf16.msra.mxu0 0
        %1502 = vmatprep.subr.bf16.mxu0 0
        %1503 = vmatpush1.bf16.msra.mxu0 0
        %1504 = vmatprep.subr.bf16.mxu0 0
        %1505 = vmatpush1.bf16.msra.mxu0 0
        %1506 = vmatprep.mubr.bf16.mxu0 0
        %1507 = vmatmul.mubr.bf16.gmra.mrb[0].mxu0 %v1409
        %v1508 = vpop.f32.mrb[0].mxu0
        %v1509 = vadd.f32 %v634, %v1508
        %v1510 = vpop.f32.mrb[0].mxu0
        %v1511 = vpop.f32.mrb[0].mxu0
        %v1512 = vpop.f32.mrb[0].mxu0
        %1513 = vdwg.mxu0
        %v1514 = vld [vmem:[%s623] sm:$0x1]
        %v1515 = vld [vmem:[%s626] sm:$0x1]
        %1516 = vadd.xlane.f32.xlu0 %v1509
        %v1517 = vpop.xlane.xlu0 %1516
        %v1518 = vmul.f32 %v1517, %v639
        %v1519 = vsub.f32 %v1509, %v1518
        %v1520 = vmul.f32 %v1519, %v1519
        %1521 = vadd.xlane.f32.xlu0 %v1520
        %v1522 = vpop.xlane.xlu0 %1521
        %v1523 = vmul.f32 %v1522, %v639
        %v1524 = vadd.f32 %v1523, 1e-05
        %v1525 = vrsqrt.pop %v1524
        %v1526 = vmul.f32 %v1519, %v1525
        %v1527 = vadd.f32 %v1514, 1.0
        %v1529 = vlaneseq
        %v1530 = vshrl.u32 %v1529, 7
        %v1531 = vsub.s32 0, %v1530
        %v1532 = vrot.slane %v1527, %v1531
        %v1534 = vmul.f32 %v1526, %v1532
        %v1536 = vlaneseq
        %v1537 = vshrl.u32 %v1536, 7
        %v1538 = vsub.s32 0, %v1537
        %v1539 = vrot.slane %v1515, %v1538
        %v1541 = vadd.f32 %v1534, %v1539
        %v1542 = vpack.c.bf16 %v1541, %v1541
        %v1543 = vld [vmem:[%s534] sm:$0xff]
        %v1544 = vld [vmem:[%s534 + $0x8] sm:$0xff]
        %v1545 = vld [vmem:[%s534 + $0x10] sm:$0xff]
        %v1546 = vld [vmem:[%s534 + $0x18] sm:$0xff]
        %v1547 = vld [vmem:[%s534 + $0x20] sm:$0xff]
        %v1548 = vld [vmem:[%s534 + $0x28] sm:$0xff]
        %v1549 = vld [vmem:[%s534 + $0x30] sm:$0xff]
        %v1550 = vld [vmem:[%s534 + $0x38] sm:$0xff]
        %v1551 = vld [vmem:[%s534 + $0x40] sm:$0xff]
        %v1552 = vld [vmem:[%s534 + $0x48] sm:$0xff]
        %v1553 = vld [vmem:[%s534 + $0x50] sm:$0xff]
        %v1554 = vld [vmem:[%s534 + $0x58] sm:$0xff]
        %v1555 = vld [vmem:[%s534 + $0x60] sm:$0xff]
        %v1556 = vld [vmem:[%s534 + $0x68] sm:$0xff]
        %v1557 = vld [vmem:[%s534 + $0x70] sm:$0xff]
        %v1558 = vld [vmem:[%s534 + $0x78] sm:$0xff]
        %v1575 = vunpack.c.l.b16 %v1543
        %v1576 = vunpack.c.h.b16 %v1543
        %v1577 = vunpack.c.l.b16 %v1544
        %v1578 = vunpack.c.h.b16 %v1544
        %v1579 = vunpack.c.l.b16 %v1545
        %v1580 = vunpack.c.h.b16 %v1545
        %v1581 = vunpack.c.l.b16 %v1546
        %v1582 = vunpack.c.h.b16 %v1546
        %v1583 = vunpack.c.l.b16 %v1547
        %v1584 = vunpack.c.h.b16 %v1547
        %v1585 = vunpack.c.l.b16 %v1548
        %v1586 = vunpack.c.h.b16 %v1548
        %v1587 = vunpack.c.l.b16 %v1549
        %v1588 = vunpack.c.h.b16 %v1549
        %v1589 = vunpack.c.l.b16 %v1550
        %v1590 = vunpack.c.h.b16 %v1550
        %v1591 = vunpack.c.l.b16 %v1551
        %v1592 = vunpack.c.h.b16 %v1551
        %v1593 = vunpack.c.l.b16 %v1552
        %v1594 = vunpack.c.h.b16 %v1552
        %v1595 = vunpack.c.l.b16 %v1553
        %v1596 = vunpack.c.h.b16 %v1553
        %v1597 = vunpack.c.l.b16 %v1554
        %v1598 = vunpack.c.h.b16 %v1554
        %v1599 = vunpack.c.l.b16 %v1555
        %v1600 = vunpack.c.h.b16 %v1555
        %v1601 = vunpack.c.l.b16 %v1556
        %v1602 = vunpack.c.h.b16 %v1556
        %v1603 = vunpack.c.l.b16 %v1557
        %v1604 = vunpack.c.h.b16 %v1557
        %v1605 = vunpack.c.l.b16 %v1558
        %v1606 = vunpack.c.h.b16 %v1558
        %v1607 = vpack.c.b16 %v1577, %v1575
        %v1608 = vpack.c.b16 %v1578, %v1576
        %v1609 = vpack.c.b16 %v1581, %v1579
        %v1610 = vpack.c.b16 %v1582, %v1580
        %v1611 = vpack.c.b16 %v1585, %v1583
        %v1612 = vpack.c.b16 %v1586, %v1584
        %v1613 = vpack.c.b16 %v1589, %v1587
        %v1614 = vpack.c.b16 %v1590, %v1588
        %v1615 = vpack.c.b16 %v1593, %v1591
        %v1616 = vpack.c.b16 %v1594, %v1592
        %v1617 = vpack.c.b16 %v1597, %v1595
        %v1618 = vpack.c.b16 %v1598, %v1596
        %v1619 = vpack.c.b16 %v1601, %v1599
        %v1620 = vpack.c.b16 %v1602, %v1600
        %v1621 = vpack.c.b16 %v1605, %v1603
        %v1622 = vpack.c.b16 %v1606, %v1604
        %1639 = vmatprep.subr.bf16.mxu0 %v1608
        %1640 = vmatpush1.bf16.msra.mxu0 %v1607
        %1641 = vmatprep.subr.bf16.mxu0 %v1610
        %1642 = vmatpush1.bf16.msra.mxu0 %v1609
        %1643 = vmatprep.subr.bf16.mxu0 %v1612
        %1644 = vmatpush1.bf16.msra.mxu0 %v1611
        %1645 = vmatprep.subr.bf16.mxu0 %v1614
        %1646 = vmatpush1.bf16.msra.mxu0 %v1613
        %1647 = vmatprep.subr.bf16.mxu0 %v1616
        %1648 = vmatpush1.bf16.msra.mxu0 %v1615
        %1649 = vmatprep.subr.bf16.mxu0 %v1618
        %1650 = vmatpush1.bf16.msra.mxu0 %v1617
        %1651 = vmatprep.subr.bf16.mxu0 %v1620
        %1652 = vmatpush1.bf16.msra.mxu0 %v1619
        %1653 = vmatprep.subr.bf16.mxu0 %v1622
        %1654 = vmatpush1.bf16.msra.mxu0 %v1621
        %1655 = vmatprep.subr.bf16.mxu0 0
        %1656 = vmatpush1.bf16.msra.mxu0 0
        %1657 = vmatprep.subr.bf16.mxu0 0
        %1658 = vmatpush1.bf16.msra.mxu0 0
        %1659 = vmatprep.subr.bf16.mxu0 0
        %1660 = vmatpush1.bf16.msra.mxu0 0
        %1661 = vmatprep.subr.bf16.mxu0 0
        %1662 = vmatpush1.bf16.msra.mxu0 0
        %1663 = vmatprep.subr.bf16.mxu0 0
        %1664 = vmatpush1.bf16.msra.mxu0 0
        %1665 = vmatprep.subr.bf16.mxu0 0
        %1666 = vmatpush1.bf16.msra.mxu0 0
        %1667 = vmatprep.subr.bf16.mxu0 0
        %1668 = vmatpush1.bf16.msra.mxu0 0
        %1669 = vmatprep.subr.bf16.mxu0 0
        %1670 = vmatpush1.bf16.msra.mxu0 0
        %1671 = vmatprep.mubr.bf16.mxu0 0
        %1672 = vmatmul.mubr.bf16.gmra.mrb[0].mxu0 %v1542
        %v1673 = vpop.f32.mrb[0].mxu0
        %v1674 = vadd.f32 0.0, %v1673
        %v1675 = vpop.f32.mrb[0].mxu0
        %v1676 = vadd.f32 0.0, %v1675
        %v1677 = vpop.f32.mrb[0].mxu0
        %v1678 = vpop.f32.mrb[0].mxu0
        %1679 = vdwg.mxu0
        %v1680 = vmax.f32 %v1674, 0.0
        %v1681 = vmax.f32 %v1676, 0.0
        %v1682 = vmul.f32 %v1680, %v1680
        %v1683 = vmul.f32 %v1681, %v1681
        %v1684 = vpack.c.bf16 %v1682, %v1682
        %v1685 = vpack.c.bf16 %v1683, %v1683
        %v1686 = vld [vmem:[%s543] sm:$0xf]
        %v1687 = vld [vmem:[%s543 + $0x4] sm:$0xf]
        %v1688 = vld [vmem:[%s543 + $0x8] sm:$0xf]
        %v1689 = vld [vmem:[%s543 + $0xc] sm:$0xf]
        %v1690 = vld [vmem:[%s543 + $0x10] sm:$0xf]
        %v1691 = vld [vmem:[%s543 + $0x14] sm:$0xf]
        %v1692 = vld [vmem:[%s543 + $0x18] sm:$0xf]
        %v1693 = vld [vmem:[%s543 + $0x1c] sm:$0xf]
        %v1694 = vld [vmem:[%s543 + $0x20] sm:$0xf]
        %v1695 = vld [vmem:[%s543 + $0x24] sm:$0xf]
        %v1696 = vld [vmem:[%s543 + $0x28] sm:$0xf]
        %v1697 = vld [vmem:[%s543 + $0x2c] sm:$0xf]
        %v1698 = vld [vmem:[%s543 + $0x30] sm:$0xf]
        %v1699 = vld [vmem:[%s543 + $0x34] sm:$0xf]
        %v1700 = vld [vmem:[%s543 + $0x38] sm:$0xf]
        %v1701 = vld [vmem:[%s543 + $0x3c] sm:$0xf]
        %v1702 = vld [vmem:[%s543 + $0x40] sm:$0xf]
        %v1703 = vld [vmem:[%s543 + $0x44] sm:$0xf]
        %v1704 = vld [vmem:[%s543 + $0x48] sm:$0xf]
        %v1705 = vld [vmem:[%s543 + $0x4c] sm:$0xf]
        %v1706 = vld [vmem:[%s543 + $0x50] sm:$0xf]
        %v1707 = vld [vmem:[%s543 + $0x54] sm:$0xf]
        %v1708 = vld [vmem:[%s543 + $0x58] sm:$0xf]
        %v1709 = vld [vmem:[%s543 + $0x5c] sm:$0xf]
        %v1710 = vld [vmem:[%s543 + $0x60] sm:$0xf]
        %v1711 = vld [vmem:[%s543 + $0x64] sm:$0xf]
        %v1712 = vld [vmem:[%s543 + $0x68] sm:$0xf]
        %v1713 = vld [vmem:[%s543 + $0x6c] sm:$0xf]
        %v1714 = vld [vmem:[%s543 + $0x70] sm:$0xf]
        %v1715 = vld [vmem:[%s543 + $0x74] sm:$0xf]
        %v1716 = vld [vmem:[%s543 + $0x78] sm:$0xf]
        %v1717 = vld [vmem:[%s543 + $0x7c] sm:$0xf]
        %v1750 = vunpack.c.l.b16 %v1686
        %v1751 = vunpack.c.l.b16 %v1687
        %v1752 = vunpack.c.l.b16 %v1688
        %v1753 = vunpack.c.l.b16 %v1689
        %v1754 = vunpack.c.l.b16 %v1690
        %v1755 = vunpack.c.l.b16 %v1691
        %v1756 = vunpack.c.l.b16 %v1692
        %v1757 = vunpack.c.l.b16 %v1693
        %v1758 = vunpack.c.l.b16 %v1694
        %v1759 = vunpack.c.l.b16 %v1695
        %v1760 = vunpack.c.l.b16 %v1696
        %v1761 = vunpack.c.l.b16 %v1697
        %v1762 = vunpack.c.l.b16 %v1698
        %v1763 = vunpack.c.l.b16 %v1699
        %v1764 = vunpack.c.l.b16 %v1700
        %v1765 = vunpack.c.l.b16 %v1701
        %v1766 = vunpack.c.l.b16 %v1702
        %v1767 = vunpack.c.l.b16 %v1703
        %v1768 = vunpack.c.l.b16 %v1704
        %v1769 = vunpack.c.l.b16 %v1705
        %v1770 = vunpack.c.l.b16 %v1706
        %v1771 = vunpack.c.l.b16 %v1707
        %v1772 = vunpack.c.l.b16 %v1708
        %v1773 = vunpack.c.l.b16 %v1709
        %v1774 = vunpack.c.l.b16 %v1710
        %v1775 = vunpack.c.l.b16 %v1711
        %v1776 = vunpack.c.l.b16 %v1712
        %v1777 = vunpack.c.l.b16 %v1713
        %v1778 = vunpack.c.l.b16 %v1714
        %v1779 = vunpack.c.l.b16 %v1715
        %v1780 = vunpack.c.l.b16 %v1716
        %v1781 = vunpack.c.l.b16 %v1717
        %v1782 = vpack.c.b16 %v1751, %v1750
        %v1783 = vpack.c.b16 %v1753, %v1752
        %v1784 = vpack.c.b16 %v1755, %v1754
        %v1785 = vpack.c.b16 %v1757, %v1756
        %v1786 = vpack.c.b16 %v1759, %v1758
        %v1787 = vpack.c.b16 %v1761, %v1760
        %v1788 = vpack.c.b16 %v1763, %v1762
        %v1789 = vpack.c.b16 %v1765, %v1764
        %v1790 = vpack.c.b16 %v1767, %v1766
        %v1791 = vpack.c.b16 %v1769, %v1768
        %v1792 = vpack.c.b16 %v1771, %v1770
        %v1793 = vpack.c.b16 %v1773, %v1772
        %v1794 = vpack.c.b16 %v1775, %v1774
        %v1795 = vpack.c.b16 %v1777, %v1776
        %v1796 = vpack.c.b16 %v1779, %v1778
        %v1797 = vpack.c.b16 %v1781, %v1780
        %1814 = vmatprep.subr.bf16.mxu0 0
        %1815 = vmatpush1.bf16.msra.mxu0 %v1782
        %1816 = vmatprep.subr.bf16.mxu0 0
        %1817 = vmatpush1.bf16.msra.mxu0 %v1783
        %1818 = vmatprep.subr.bf16.mxu0 0
        %1819 = vmatpush1.bf16.msra.mxu0 %v1784
        %1820 = vmatprep.subr.bf16.mxu0 0
        %1821 = vmatpush1.bf16.msra.mxu0 %v1785
        %1822 = vmatprep.subr.bf16.mxu0 0
        %1823 = vmatpush1.bf16.msra.mxu0 %v1786
        %1824 = vmatprep.subr.bf16.mxu0 0
        %1825 = vmatpush1.bf16.msra.mxu0 %v1787
        %1826 = vmatprep.subr.bf16.mxu0 0
        %1827 = vmatpush1.bf16.msra.mxu0 %v1788
        %1828 = vmatprep.subr.bf16.mxu0 0
        %1829 = vmatpush1.bf16.msra.mxu0 %v1789
        %1830 = vmatprep.subr.bf16.mxu0 0
        %1831 = vmatpush1.bf16.msra.mxu0 %v1790
        %1832 = vmatprep.subr.bf16.mxu0 0
        %1833 = vmatpush1.bf16.msra.mxu0 %v1791
        %1834 = vmatprep.subr.bf16.mxu0 0
        %1835 = vmatpush1.bf16.msra.mxu0 %v1792
        %1836 = vmatprep.subr.bf16.mxu0 0
        %1837 = vmatpush1.bf16.msra.mxu0 %v1793
        %1838 = vmatprep.subr.bf16.mxu0 0
        %1839 = vmatpush1.bf16.msra.mxu0 %v1794
        %1840 = vmatprep.subr.bf16.mxu0 0
        %1841 = vmatpush1.bf16.msra.mxu0 %v1795
        %1842 = vmatprep.subr.bf16.mxu0 0
        %1843 = vmatpush1.bf16.msra.mxu0 %v1796
        %1844 = vmatprep.subr.bf16.mxu0 0
        %1845 = vmatpush1.bf16.msra.mxu0 %v1797
        %1846 = vmatprep.mubr.bf16.mxu0 %v1685
        %1847 = vmatmul.mubr.bf16.gmra.mrb[0].mxu0 %v1684
        %v1848 = vpop.f32.mrb[0].mxu0
        %v1849 = vadd.f32 %v1509, %v1848
        %v1850 = vpop.f32.mrb[0].mxu0
        %v1851 = vpop.f32.mrb[0].mxu0
        %v1852 = vpop.f32.mrb[0].mxu0
        %1853 = vdwg.mxu0
        %1854 = vst [vmem:[#allocation2] sm:$0xff] %v1849
        %p1855 = scmp.eq.s32.totalorder %s32, 1
        // Predicated region
        $region93: #{nemotron_forward.1} parent=75 // pred_check
          %p1856 = pneg %p1855
        $region94: #{nemotron_forward.1} parent=75 // pred_check_branch
          %1858 = sbr.rel (%p1856) target = $region96
        $region95: #{nemotron_forward.1} parent=75 // pred_region
          %v1859 = vld [vmem:[%s12] sm:$0x1]
          %v1860 = vld [vmem:[%s13] sm:$0x1]
          %1861 = vadd.xlane.f32.xlu0 %v1849
          %v1862 = vpop.xlane.xlu0 %1861
          %v1863 = vmul.f32 %v1862, %v639
          %v1864 = vsub.f32 %v1849, %v1863
          %v1865 = vmul.f32 %v1864, %v1864
          %1866 = vadd.xlane.f32.xlu0 %v1865
          %v1867 = vpop.xlane.xlu0 %1866
          %v1868 = vmul.f32 %v1867, %v639
          %v1869 = vadd.f32 %v1868, 1e-05
          %v1870 = vrsqrt.pop %v1869
          %v1871 = vmul.f32 %v1864, %v1870
          %v1872 = vadd.f32 %v1859, 1.0
          %v1874 = vlaneseq
          %v1875 = vshrl.u32 %v1874, 7
          %v1876 = vsub.s32 0, %v1875
          %v1877 = vrot.slane %v1872, %v1876
          %v1879 = vmul.f32 %v1871, %v1877
          %v1881 = vlaneseq
          %v1882 = vshrl.u32 %v1881, 7
          %v1883 = vsub.s32 0, %v1882
          %v1884 = vrot.slane %v1860, %v1883
          %v1886 = vadd.f32 %v1879, %v1884
          %1887 = vst [vmem:[#allocation9] sm:$0xff] %v1886
        $region96: #{nemotron_forward.1} parent=75 // pred_fallthru
          _
        // Predicated region
        $region97: #{nemotron_forward.1} parent=75 // pred_check
          %p1888 = pneg %p379
        $region98: #{nemotron_forward.1} parent=75 // pred_check_branch
          %1890 = sbr.rel (%p1888) target = $region100
        $region99: #{nemotron_forward.1} parent=75 // pred_region
          %s1892 = ssub.s32 128, 128
          %1893 = vsyncadd [#allocation5], %s1892
          %s1895 = sshll.u32 [#allocation9], 4
          %s1896 = int_to_ptr.vmem [resolvable:$true] %s1895
          %1898 = dma.vmem_to_hbm [thread:$0]  %s1896, 128, %s14, [#allocation5]
        $region100: #{nemotron_forward.1} parent=75 // pred_fallthru
          _
        // Predicated region
        $region101: #{nemotron_forward.1} parent=75 // pred_check
          %p1899 = pneg %p379
        $region102: #{nemotron_forward.1} parent=75 // pred_check_branch
          %1901 = sbr.rel (%p1899) target = $region104
        $region103: #{nemotron_forward.1} parent=75 // pred_region
          %1902 = dma.done [#allocation5], 128
        $region104: #{nemotron_forward.1} parent=75 // pred_fallthru
          _
      $region76: #{nemotron_forward.1} parent=5 // pred_fallthru
        _
      %p1903 = scmp.le.s32.totalorder 2, %s27
      // Predicated region
      $region105: #{nemotron_forward.1} parent=5 // pred_check
        %p1904 = pneg %p1903
      $region106: #{nemotron_forward.1} parent=5 // pred_check_branch
        %1906 = sbr.rel (%p1904) target = $region108
      $region107: #{nemotron_forward.1} parent=5 // pred_region
        %s1907 = ssub.s32 %s27, 2
      $region108: #{nemotron_forward.1} parent=5 // pred_fallthru
        _
    $region6: #{nemotron_forward.1} parent=1 // loop_footer
      %s31 = sadd.s32 1, %s27
    $region7: #{nemotron_forward.1} parent=1 // loop_footer_branch
      %26 = sbr.rel target = $region3
    $region8: #{nemotron_forward.1} parent=1 // loop_exit
      _
    %1908 = vsyncpa [#allocation4], 1
    %s1909 = scalar_lea.sflag [#allocation4], 1
    %1910 = vsyncpa %s1909, 1
    %1911 = vsyncpa [#allocation7], 1
    %s1912 = scalar_lea.sflag [#allocation7], 1
    %1913 = vsyncpa %s1912, 1
    %1914 = vsyncpa [#allocation5], 1
    %s1915 = scalar_lea.sflag [#allocation5], 1
    %1916 = vsyncpa %s1915, 1

</llo_original>
